<compile_context>
chip_gen: v6e
topology: v6e:2x2x1
jax: 0.10.0
libtpu: 0.0.40
codegen_flags: <defaults>
</compile_context>

<pallas_src>
import functools
import math

import jax
import jax.numpy as jnp
from jax import lax
from jax.experimental import pallas as pl
from jax.experimental.pallas import tpu as pltpu


def _round_up(x: int, m: int) -> int:
    return ((x + m - 1) // m) * m


# -----------------------------------------------------------------------------
# Path A: small vocab -> whole table VMEM-resident, one-hot MXU gather.
# -----------------------------------------------------------------------------
def _embed_onehot_kernel(ids_ref, table_ref, out_ref, *, vocab_size, scale):
    ids = ids_ref[...]                                        # (tok_block, 1) i32
    tok_block = ids.shape[0]
    iota = lax.broadcasted_iota(jnp.int32, (tok_block, vocab_size), 1)
    one_hot = (iota == ids).astype(table_ref.dtype)           # (tok_block, V)
    rows = jnp.dot(one_hot, table_ref[...],
                   preferred_element_type=jnp.float32)        # (tok_block, D)
    out_ref[...] = (rows * scale).astype(out_ref.dtype)


# -----------------------------------------------------------------------------
# Path B: large vocab -> HBM table, double-buffered per-row DMA gather.
# -----------------------------------------------------------------------------
def _embed_gather_kernel(ids_ref, emb_hbm, out_ref, buf, sems, *,
                         tok_block, scale):
    """ids_ref : SMEM scalar-prefetch (n_pad,) int32 (already clamped)
       emb_hbm : HBM ref (vocab_size, d_model)  (memory_space=pl.ANY)
       out_ref : VMEM output tile (tok_block, d_model)
       buf     : VMEM scratch (2, tok_block, d_model) -- gather double-buffer
       sems    : DMA semaphores, shape (2,)"""
    i = pl.program_id(0)
    nsteps = pl.num_programs(0)

    def issue_tile(tile_idx, slot):
        base = tile_idx * tok_block

        def body(t, carry):
            # Raw address math + descriptor push only (clamp hoisted to wrapper).
            pltpu.make_async_copy(emb_hbm.at[ids_ref[base + t]],
                                  buf.at[slot, t],
                                  sems.at[slot]).start()
            return carry

        # Unrolled so SMEM id loads / scalar math / descriptor pushes co-issue.
        lax.fori_loop(0, tok_block, body, None, unroll=8)

    # Prime the pipeline: first step issues its own tile's gather.
    @pl.when(i == 0)
    def _():
        issue_tile(0, 0)

    # Prefetch next tile's rows before waiting on this tile (hides HBM latency).
    @pl.when(i + 1 < nsteps)
    def _():
        issue_tile(i + 1, (i + 1) % 2)

    slot = i % 2
    # Aggregate wait: one descriptor sized like the whole tile consumes the
    # same semaphore byte count as the tok_block row copies (never started).
    pltpu.make_async_copy(buf.at[0], out_ref, sems.at[slot]).wait()

    # Single full-tile, lane-dense scale by sqrt(d_model).
    out_ref[...] = (buf[slot] * scale).astype(out_ref.dtype)


# -----------------------------------------------------------------------------
# Wrapper
# -----------------------------------------------------------------------------
def input_embedding(ids, emb_table, *,
                    vmem_table_budget_bytes=4 * 1024 * 1024,
                    force_hbm_gather=False):
    """ids: (B, S) int token ids; emb_table: (vocab_size, d_model).

    Returns (B, S, d_model) = emb_table[ids] * sqrt(d_model).
    """
    B, S = ids.shape
    vocab_size, d_model = emb_table.shape
    N = B * S
    scale = math.sqrt(float(d_model))
    itemsize = emb_table.dtype.itemsize
    row_bytes = d_model * itemsize

    # Hoisted, vectorized clamp (torch raises on OOB ids; we saturate).
    flat_ids = jnp.clip(ids.reshape(N).astype(jnp.int32), 0, vocab_size - 1)

    table_bytes = vocab_size * d_model * itemsize
    use_vmem_table = (table_bytes <= vmem_table_budget_bytes
                      and not force_hbm_gather)

    if use_vmem_table:
        # ---- Path A: whole table in VMEM, one-hot MXU gather ----
        tok_block = min((2 * 1024 * 1024) // row_bytes,          # out tile ~2 MiB
                        (4 * 1024 * 1024) // (4 * vocab_size))   # one-hot ~4 MiB
        tok_block = max(8, min(1024, tok_block))
        # Keep >=2 independent tiles when possible so both v7x TCs get work.
        tok_block = min(tok_block, max(8, _round_up(pl.cdiv(N, 2), 8)))
        tok_block = _round_up(tok_block, 8)
        n_pad = _round_up(N, tok_block)
        ids2d = jnp.pad(flat_ids, (0, n_pad - N)).reshape(n_pad, 1)

        kernel = functools.partial(_embed_onehot_kernel,
                                   vocab_size=vocab_size, scale=scale)
        out_flat = pl.pallas_call(
            kernel,
            out_shape=jax.ShapeDtypeStruct((n_pad, d_model), emb_table.dtype),
            grid=(n_pad // tok_block,),
            in_specs=[
                pl.BlockSpec((tok_block, 1), lambda i: (i, 0)),
                # Grid-invariant block: table DMA'd to VMEM once, then resident.
                pl.BlockSpec((vocab_size, d_model), lambda i: (0, 0)),
            ],
            out_specs=pl.BlockSpec((tok_block, d_model), lambda i: (i, 0)),
            compiler_params=pltpu.CompilerParams(
                dimension_semantics=("parallel",),
                vmem_limit_bytes=32 * 1024 * 1024,
            ),
        )(ids2d, emb_table)
    else:
        # ---- Path B: HBM table, double-buffered per-row DMA gather ----
        tok_block = max(128, min(2048, (2 * 1024 * 1024) // row_bytes))
        tok_block = min(tok_block, max(8, _round_up(pl.cdiv(N, 2), 8)))
        tok_block = _round_up(tok_block, 8)
        n_pad = _round_up(N, tok_block)
        flat_pad = jnp.pad(flat_ids, (0, n_pad - N))   # padded ids gather row 0

        kernel = functools.partial(_embed_gather_kernel,
                                   tok_block=tok_block, scale=scale)
        out_flat = pl.pallas_call(
            kernel,
            out_shape=jax.ShapeDtypeStruct((n_pad, d_model), emb_table.dtype),
            grid_spec=pltpu.PrefetchScalarGridSpec(
                num_scalar_prefetch=1,                 # flat ids -> SMEM
                grid=(n_pad // tok_block,),
                in_specs=[
                    # Table stays in HBM; rows DMA-gathered on demand.
                    pl.BlockSpec(memory_space=pl.ANY),
                ],
                out_specs=pl.BlockSpec((tok_block, d_model),
                                       lambda i, ids: (i, 0)),
                scratch_shapes=[
                    pltpu.VMEM((2, tok_block, d_model), emb_table.dtype),
                    pltpu.SemaphoreType.DMA((2,)),
                ],
            ),
            # "arbitrary": the gather double-buffer carries state across grid
            # steps (priming at program_id==0), which is unsafe to split
            # across cores with "parallel".
            compiler_params=pltpu.CompilerParams(
                dimension_semantics=("arbitrary",),
                vmem_limit_bytes=32 * 1024 * 1024,
            ),
        )(flat_pad, emb_table)

    if n_pad != N:
        out_flat = out_flat[:N]
    return out_flat.reshape(B, S, d_model)


if __name__ == "__main__":
    # Mirrors InputEmbedding(d_model, vocab_size) at small, deterministic shapes.
    d_model = 256
    vocab_size = 1000
    batch, seq = 4, 96          # N = 384 tokens -> 2 tiles of 192

    key = jax.random.PRNGKey(0)
    k_emb, k_ids = jax.random.split(key)

    # nn.Embedding default init: weight ~ N(0, 1)
    emb_table = jax.random.normal(k_emb, (vocab_size, d_model), dtype=jnp.float32)
    ids = jax.random.randint(k_ids, (batch, seq), minval=0, maxval=vocab_size,
                             dtype=jnp.int32)

    ref = emb_table[ids] * math.sqrt(float(d_model))

    # Small-vocab fast path (whole table VMEM-resident, one-hot MXU gather).
    out_fast = jax.block_until_ready(input_embedding(ids, emb_table))
    assert out_fast.shape == (batch, seq, d_model)
    assert out_fast.dtype == jnp.float32
    # One non-zero term per row; tolerance covers MXU per-pass rounding of the
    # f32 table rows.
    assert jnp.allclose(out_fast, ref, atol=1e-3, rtol=3e-3), \
        "fast-path mismatch vs reference"

    # Large-vocab path forced on the same inputs (exact row gather via DMA).
    out_gather = jax.block_until_ready(
        input_embedding(ids, emb_table, force_hbm_gather=True))
    assert out_gather.shape == (batch, seq, d_model)
    assert jnp.allclose(out_gather, ref, atol=1e-5, rtol=1e-5), \
        "gather-path mismatch vs reference"

    print("KERNEL_OK")
</pallas_src>

<mosaic_0001>
module attributes {stable_mosaic.version = 11 : i64} {
  func.func @_embed_onehot_kernel(%arg0: i32, %arg1: memref<192x1xi32, #tpu.memory_space<vmem>>, %arg2: memref<1000x256xf32, #tpu.memory_space<vmem>>, %arg3: memref<192x256xf32, #tpu.memory_space<vmem>>) attributes {dimension_semantics = [#tpu.dimension_semantics<parallel>], iteration_bounds = array<i64: 2>, scalar_prefetch = 0 : i64, scratch_operands = 0 : i64, tpu.core_type = #tpu.core_type<tc>, window_params = [{transform_indices = @transform_0, window_bounds = array<i64: 192, 1>}, {pipeline_mode = #tpu.pipeline_mode<synchronous>, transform_indices = @transform_1, window_bounds = array<i64: 1000, 256>}, {transform_indices = @transform_2, window_bounds = array<i64: 192, 256>}]} {
    %c0 = arith.constant 0 : index
    %c0_0 = arith.constant 0 : index
    %0 = vector.load %arg1[%c0, %c0_0] : memref<192x1xi32, #tpu.memory_space<vmem>>, vector<192x1xi32>
    %1 = tpu.iota {dimensions = array<i32: 1>} : vector<192x1000xi32>
    %2 = vector.broadcast %0 : vector<192x1xi32> to vector<192x1000xi32>
    %3 = arith.cmpi eq, %1, %2 : vector<192x1000xi32>
    %4 = arith.extui %3 : vector<192x1000xi1> to vector<192x1000xi32>
    %5 = arith.sitofp %4 : vector<192x1000xi32> to vector<192x1000xf32>
    %c0_1 = arith.constant 0 : index
    %c0_2 = arith.constant 0 : index
    %6 = vector.load %arg2[%c0_1, %c0_2] : memref<1000x256xf32, #tpu.memory_space<vmem>>, vector<1000x256xf32>
    %cst = arith.constant dense<0.000000e+00> : vector<192x256xf32>
    %7 = tpu.matmul %5, %6, %cst {dimension_numbers = #tpu.dot_dimension_numbers<[1], [0], [0], [1], [0, 0, 1, 1], [], []>} : vector<192x1000xf32>, vector<1000x256xf32>, vector<192x256xf32> -> vector<192x256xf32>
    %cst_3 = arith.constant 1.600000e+01 : f32
    %8 = vector.broadcast %cst_3 : f32 to vector<192x256xf32>
    %9 = arith.mulf %7, %8 : vector<192x256xf32>
    %c0_4 = arith.constant 0 : index
    %c0_5 = arith.constant 0 : index
    %10 = vector.load %arg3[%c0_4, %c0_5] : memref<192x256xf32, #tpu.memory_space<vmem>>, vector<192x256xf32>
    tpu.vector_store %arg3[%c0_4, %c0_5], %9 {strides = array<i32>} : memref<192x256xf32, #tpu.memory_space<vmem>>, vector<192x256xf32>,
    return
  }
  func.func @transform_0(%arg0: i32) -> (i32, i32) {
    %c0_i32 = arith.constant 0 : i32
    %c0_i32_0 = arith.constant 0 : i32
    return %arg0, %c0_i32 : i32, i32
  }
  func.func @transform_1(%arg0: i32) -> (i32, i32) {
    %c0_i32 = arith.constant 0 : i32
    %c0_i32_0 = arith.constant 0 : i32
    %c0_i32_1 = arith.constant 0 : i32
    return %c0_i32, %c0_i32_0 : i32, i32
  }
  func.func @transform_2(%arg0: i32) -> (i32, i32) {
    %c0_i32 = arith.constant 0 : i32
    %c0_i32_0 = arith.constant 0 : i32
    return %arg0, %c0_i32 : i32, i32
  }
}

</mosaic_0001>

<llo_original>
// kernel: tpu_custom_call.1
$region0: #{tpu_custom_call.1}
  #allocation0 [shape = 'u32[]', space=smem, size = 0x4, offset = 0x4, fixed_abs, tag = 'smem constant byte address 0x4 - core index']
  #allocation1 [shape = 'u32[144,128]{1,0:T(1,128)}', space=vmem, size = 0x12000, scoped, tag = 'internal scratch']
  %s0 = inlined_call_operand.vmem [shape: s32[384,1], index: 0, kind: input, shape index: {}]
  %s1 = inlined_call_operand.hbm [shape: f32[1000,256], index: 1, kind: input, shape index: {}]
  %s2 = inlined_call_operand.hbm [shape: f32[384,256], index: 2, kind: output, shape index: {}]
  %s3 = sld [smem:[#allocation0]]
  $region45: #{tpu_custom_call.1} parent=0
    _
  %s5 = ssub.s32 1, %s3
  %s6 = scalar_select 0, %s5, %s3
  $region1: #{tpu_custom_call.1} parent=0
    #allocation2 [shape = 'u8[1024000]{0}', space=vmem, size = 0xfa000, scoped, tag = 'input window, operand 1, single buffered']
    #allocation3 [shape = 's32[2]{0}', space=sflag, size = 0x8, scoped, tag = 'scoped memory for tpu_custom_call.1']
    #allocation4 [shape = 's32[2]{0}', space=sflag, size = 0x8, scoped, tag = 'scoped memory for tpu_custom_call.1']
    #allocation5 [shape = 'u8[393216]{0}', space=vmem, size = 0x60000, scoped, tag = 'output window, operand 0']
    %7 = vsyncpa [#allocation3], 0
    %8 = vsyncpa [#allocation4], 0
    %s9 = scalar_lea.sflag [#allocation4], 1
    %10 = vsyncpa %s9, 0
    loop: start=0, step=1, limit=4
    $region2: #{tpu_custom_call.1} parent=1 // loop_pre_header
      _
    $region3: #{tpu_custom_call.1} parent=1 // loop_header
      %s12 = sphi 0, %s16
      %p13 = scmp.ge.s32.totalorder %s12, 4
      %s22 = sphi 0, %s24
      %s25 = sphi 0, %s22
      %s26 = sphi 0, %s25
      %s42 = sphi 0, %s26
      %s46 = sphi 0, %s46
      %s48 = sphi 0, %s46
      %s49 = sphi 0, %s48
      %s63 = sphi 0, %s49
      %s69 = sphi 0, %s71
      %s72 = sphi 0, %s69
      %s73 = sphi 0, %s72
      %s89 = sphi 0, %s73
    $region4: #{tpu_custom_call.1} parent=1 // loop_header_branch
      %15 = sbr.rel (%p13) target = $region8
    $region5: #{tpu_custom_call.1} parent=1 // loop_body
      %s17 = ssub.s32 %s12, 1
      %s18 = ssub.s32 %s12, 2
      %s19 = sadd.s32 %s12, 1
      %s20 = ssub.s32 %s12, %s19
      %p21 = scmp.eq.s32.totalorder %s20, 0
      %s23 = sadd.s32 %s22, 1
      %s24 = scalar_select %p21, %s22, %s23
      %p27 = pneg %p21
      %p28 = scmp.eq.s32.totalorder %s12, 1
      %p29 = por %p27, %p28
      %p30 = scmp.ne.s32.totalorder %s22, %s25
      %p31 = scmp.eq.s32.totalorder %s12, 0
      %p32 = por %p30, %p31
      %p33 = scmp.ne.s32.totalorder %s22, %s25
      %p34 = scmp.eq.s32.totalorder %s17, 1
      %p35 = por %p33, %p34
      %p36 = scmp.ne.s32.totalorder %s25, %s26
      %p37 = scmp.eq.s32.totalorder %s17, 0
      %p38 = por %p36, %p37
      %p39 = scmp.ne.s32.totalorder %s25, %s26
      %p40 = scmp.eq.s32.totalorder %s18, 1
      %p41 = por %p39, %p40
      %p43 = scmp.ne.s32.totalorder %s26, %s42
      %p44 = scmp.eq.s32.totalorder %s18, 0
      %p45 = por %p43, %p44
      %s47 = sadd.s32 %s46, 1
      %p50 = scmp.eq.s32.totalorder %s12, 1
      %p51 = scmp.ne.s32.totalorder %s46, %s48
      %p52 = scmp.eq.s32.totalorder %s12, 0
      %p53 = por %p51, %p52
      %p54 = scmp.ne.s32.totalorder %s46, %s48
      %p55 = scmp.eq.s32.totalorder %s17, 1
      %p56 = por %p54, %p55
      %p57 = scmp.ne.s32.totalorder %s48, %s49
      %p58 = scmp.eq.s32.totalorder %s17, 0
      %p59 = por %p57, %p58
      %p60 = scmp.ne.s32.totalorder %s48, %s49
      %p61 = scmp.eq.s32.totalorder %s18, 1
      %p62 = por %p60, %p61
      %p64 = scmp.ne.s32.totalorder %s49, %s63
      %p65 = scmp.eq.s32.totalorder %s18, 0
      %p66 = por %p64, %p65
      %s67 = ssub.s32 %s12, %s19
      %p68 = scmp.eq.s32.totalorder %s67, 0
      %s70 = sadd.s32 %s69, 1
      %s71 = scalar_select %p68, %s69, %s70
      %p74 = pneg %p68
      %p75 = scmp.eq.s32.totalorder %s12, 1
      %p76 = por %p74, %p75
      %p77 = scmp.ne.s32.totalorder %s69, %s72
      %p78 = scmp.eq.s32.totalorder %s12, 0
      %p79 = por %p77, %p78
      %p80 = scmp.ne.s32.totalorder %s69, %s72
      %p81 = scmp.eq.s32.totalorder %s17, 1
      %p82 = por %p80, %p81
      %p83 = scmp.ne.s32.totalorder %s72, %s73
      %p84 = scmp.eq.s32.totalorder %s17, 0
      %p85 = por %p83, %p84
      %p86 = scmp.ne.s32.totalorder %s72, %s73
      %p87 = scmp.eq.s32.totalorder %s18, 1
      %p88 = por %p86, %p87
      %p90 = scmp.ne.s32.totalorder %s73, %s89
      %p91 = scmp.eq.s32.totalorder %s18, 0
      %p92 = por %p90, %p91
      %p93 = scmp.le.s32.totalorder 1, %s12
      %p94 = scmp.lt.s32.totalorder %s12, 3
      %p95 = pnand %p93, %p94
      %p96 = pneg %p95
      // Predicated region
      $region9: #{tpu_custom_call.1} parent=5 // pred_check
        _
      $region10: #{tpu_custom_call.1} parent=5 // pred_check_branch
        %98 = sbr.rel (%p95) target = $region12
      $region11: #{tpu_custom_call.1} parent=5 // pred_region
        %s99 = ssub.s32 %s12, 1
        // Predicated region
        $region13: #{tpu_custom_call.1} parent=11 // pred_check
          %p100 = pneg %p59
        $region14: #{tpu_custom_call.1} parent=11 // pred_check_branch
          %102 = sbr.rel (%p100) target = $region16
        $region15: #{tpu_custom_call.1} parent=11 // pred_region
          %s104 = ssub.s32 32000, 32000
          %105 = vsyncadd [#allocation3], %s104
          %s106 = sshll.u32 [#allocation2], 4
          %s107 = int_to_ptr.vmem [resolvable:$true] %s106
          %112 = dma.hbm_to_vmem [thread:$0]  %s1, 32000, %s107, [#allocation3], 256, 256, 16
        $region16: #{tpu_custom_call.1} parent=11 // pred_fallthru
          _
      $region12: #{tpu_custom_call.1} parent=5 // pred_fallthru
        _
      %p113 = scmp.lt.s32.totalorder %s12, 2
      // Predicated region
      $region17: #{tpu_custom_call.1} parent=5 // pred_check
        %p114 = pneg %p113
      $region18: #{tpu_custom_call.1} parent=5 // pred_check_branch
        %116 = sbr.rel (%p114) target = $region20
      $region19: #{tpu_custom_call.1} parent=5 // pred_region
        // Predicated region
        $region21: #{tpu_custom_call.1} parent=19 // pred_check
          %p117 = pneg %p32
        $region22: #{tpu_custom_call.1} parent=19 // pred_check_branch
          %119 = sbr.rel (%p117) target = $region24
        $region23: #{tpu_custom_call.1} parent=19 // pred_region
          %s120 = smul.u32 24, %s12
          %p121 = scmp.lt.s32.totalorder %s120, 47
          %s122 = scalar_select %p121, %s120, 47
          %s123 = smul.addr %s122, 8
          %s124 = scalar_lea.vmem %s0, %s123
          %s125 = smul.u32 24, %s12
        $region24: #{tpu_custom_call.1} parent=19 // pred_fallthru
          _
      $region20: #{tpu_custom_call.1} parent=5 // pred_fallthru
        _
      %p126 = scmp.le.s32.totalorder 1, %s12
      %p127 = scmp.lt.s32.totalorder %s12, 3
      %p128 = pnand %p126, %p127
      %p129 = pneg %p128
      // Predicated region
      $region25: #{tpu_custom_call.1} parent=5 // pred_check
        _
      $region26: #{tpu_custom_call.1} parent=5 // pred_check_branch
        %131 = sbr.rel (%p128) target = $region28
      $region27: #{tpu_custom_call.1} parent=5 // pred_region
        %s132 = ssub.s32 %s12, 1
        // Predicated region
        $region29: #{tpu_custom_call.1} parent=27 // pred_check
          %p133 = pneg %p59
        $region30: #{tpu_custom_call.1} parent=27 // pred_check_branch
          %135 = sbr.rel (%p133) target = $region32
        $region31: #{tpu_custom_call.1} parent=27 // pred_region
          %136 = dma.done [#allocation3], 32000
        $region32: #{tpu_custom_call.1} parent=27 // pred_fallthru
          _
        %s137 = smul.u32 24, %s17
        %p138 = scmp.lt.s32.totalorder %s137, 47
        %s139 = scalar_select %p138, %s137, 47
        %s140 = smul.addr %s139, 8
        %s141 = scalar_lea.vmem %s0, %s140
        %p142 = pneg %p38
        %p143 = pneg %p35
        %p144 = pneg %p59
        %p145 = pneg %p56
        %p146 = pneg %p85
        %p147 = pneg %p82
        %s148 = sand.u32 %s72, 1
        %s149 = scalar_lea.sflag [#allocation4], %s148
        %s150 = sand.u32 %s72, 1
        %s151 = smul.addr %s150, 384
        %s152 = scalar_lea.vmem [#allocation5], %s151
        %s153 = smul.u32 24, %s17
        %p154 = scmp.lt.s32.totalorder %s153, 47
        %s155 = scalar_select %p154, %s153, 47
        %s156 = smul.addr %s155, 8
        %s157 = scalar_lea.vmem %s0, %s156
        %s158 = smul.u32 24, %s17
        %s159 = smul.u32 24, %s17
        %v160 = vld [vmem:[%s157] sm:$0xff]
        %v161 = vld [vmem:[%s157 + $0x8] sm:$0xff]
        %v162 = vld [vmem:[%s157 + $0x10] sm:$0xff]
        %v163 = vld [vmem:[%s157 + $0x18] sm:$0xff]
        %v164 = vld [vmem:[%s157 + $0x20] sm:$0xff]
        %v165 = vld [vmem:[%s157 + $0x28] sm:$0xff]
        %v166 = vld [vmem:[%s157 + $0x30] sm:$0xff]
        %v167 = vld [vmem:[%s157 + $0x38] sm:$0xff]
        %v168 = vld [vmem:[%s157 + $0x40] sm:$0xff]
        %v169 = vld [vmem:[%s157 + $0x48] sm:$0xff]
        %v170 = vld [vmem:[%s157 + $0x50] sm:$0xff]
        %v171 = vld [vmem:[%s157 + $0x58] sm:$0xff]
        %v172 = vld [vmem:[%s157 + $0x60] sm:$0xff]
        %v173 = vld [vmem:[%s157 + $0x68] sm:$0xff]
        %v174 = vld [vmem:[%s157 + $0x70] sm:$0xff]
        %v175 = vld [vmem:[%s157 + $0x78] sm:$0xff]
        %v176 = vld [vmem:[%s157 + $0x80] sm:$0xff]
        %v177 = vld [vmem:[%s157 + $0x88] sm:$0xff]
        %v178 = vld [vmem:[%s157 + $0x90] sm:$0xff]
        %v179 = vld [vmem:[%s157 + $0x98] sm:$0xff]
        %v180 = vld [vmem:[%s157 + $0xa0] sm:$0xff]
        %v181 = vld [vmem:[%s157 + $0xa8] sm:$0xff]
        %v182 = vld [vmem:[%s157 + $0xb0] sm:$0xff]
        %v183 = vld [vmem:[%s157 + $0xb8] sm:$0xff]
        %v184 = vlaneseq
        %v185 = vand.u32 %v184, 127
        %v186 = vadd.s32 %v185, 128
        %v187 = vadd.s32 %v185, 256
        %v188 = vadd.s32 %v185, 384
        %v189 = vadd.s32 %v185, 512
        %v190 = vadd.s32 %v185, 640
        %v191 = vadd.s32 %v185, 768
        %v192 = vadd.s32 %v185, 896
        %193 = vset.pattern.permute.xlu0 0
        %194 = vperm.xlu0 %193, %v160
        %v195 = vpop.permute.xlu0 %194
        %196 = vset.pattern.permute.xlu0 0
        %197 = vperm.xlu0 %196, %v161
        %v198 = vpop.permute.xlu0 %197
        %199 = vset.pattern.permute.xlu0 0
        %200 = vperm.xlu0 %199, %v162
        %v201 = vpop.permute.xlu0 %200
        %202 = vset.pattern.permute.xlu0 0
        %203 = vperm.xlu0 %202, %v163
        %v204 = vpop.permute.xlu0 %203
        %205 = vset.pattern.permute.xlu0 0
        %206 = vperm.xlu0 %205, %v164
        %v207 = vpop.permute.xlu0 %206
        %208 = vset.pattern.permute.xlu0 0
        %209 = vperm.xlu0 %208, %v165
        %v210 = vpop.permute.xlu0 %209
        %211 = vset.pattern.permute.xlu0 0
        %212 = vperm.xlu0 %211, %v166
        %v213 = vpop.permute.xlu0 %212
        %214 = vset.pattern.permute.xlu0 0
        %215 = vperm.xlu0 %214, %v167
        %v216 = vpop.permute.xlu0 %215
        %217 = vset.pattern.permute.xlu0 0
        %218 = vperm.xlu0 %217, %v168
        %v219 = vpop.permute.xlu0 %218
        %220 = vset.pattern.permute.xlu0 0
        %221 = vperm.xlu0 %220, %v169
        %v222 = vpop.permute.xlu0 %221
        %223 = vset.pattern.permute.xlu0 0
        %224 = vperm.xlu0 %223, %v170
        %v225 = vpop.permute.xlu0 %224
        %226 = vset.pattern.permute.xlu0 0
        %227 = vperm.xlu0 %226, %v171
        %v228 = vpop.permute.xlu0 %227
        %229 = vset.pattern.permute.xlu0 0
        %230 = vperm.xlu0 %229, %v172
        %v231 = vpop.permute.xlu0 %230
        %232 = vset.pattern.permute.xlu0 0
        %233 = vperm.xlu0 %232, %v173
        %v234 = vpop.permute.xlu0 %233
        %235 = vset.pattern.permute.xlu0 0
        %236 = vperm.xlu0 %235, %v174
        %v237 = vpop.permute.xlu0 %236
        %238 = vset.pattern.permute.xlu0 0
        %239 = vperm.xlu0 %238, %v175
        %v240 = vpop.permute.xlu0 %239
        %241 = vset.pattern.permute.xlu0 0
        %242 = vperm.xlu0 %241, %v176
        %v243 = vpop.permute.xlu0 %242
        %244 = vset.pattern.permute.xlu0 0
        %245 = vperm.xlu0 %244, %v177
        %v246 = vpop.permute.xlu0 %245
        %247 = vset.pattern.permute.xlu0 0
        %248 = vperm.xlu0 %247, %v178
        %v249 = vpop.permute.xlu0 %248
        %250 = vset.pattern.permute.xlu0 0
        %251 = vperm.xlu0 %250, %v179
        %v252 = vpop.permute.xlu0 %251
        %253 = vset.pattern.permute.xlu0 0
        %254 = vperm.xlu0 %253, %v180
        %v255 = vpop.permute.xlu0 %254
        %256 = vset.pattern.permute.xlu0 0
        %257 = vperm.xlu0 %256, %v181
        %v258 = vpop.permute.xlu0 %257
        %259 = vset.pattern.permute.xlu0 0
        %260 = vperm.xlu0 %259, %v182
        %v261 = vpop.permute.xlu0 %260
        %262 = vset.pattern.permute.xlu0 0
        %263 = vperm.xlu0 %262, %v183
        %v264 = vpop.permute.xlu0 %263
        %vm265 = vcmp.eq.s32.totalorder %v185, %v195
        %vm266 = vcmp.eq.s32.totalorder %v186, %v195
        %vm267 = vcmp.eq.s32.totalorder %v187, %v195
        %vm268 = vcmp.eq.s32.totalorder %v188, %v195
        %vm269 = vcmp.eq.s32.totalorder %v189, %v195
        %vm270 = vcmp.eq.s32.totalorder %v190, %v195
        %vm271 = vcmp.eq.s32.totalorder %v191, %v195
        %vm272 = vcmp.eq.s32.totalorder %v192, %v195
        %vm273 = vcmp.eq.s32.totalorder %v185, %v198
        %vm274 = vcmp.eq.s32.totalorder %v186, %v198
        %vm275 = vcmp.eq.s32.totalorder %v187, %v198
        %vm276 = vcmp.eq.s32.totalorder %v188, %v198
        %vm277 = vcmp.eq.s32.totalorder %v189, %v198
        %vm278 = vcmp.eq.s32.totalorder %v190, %v198
        %vm279 = vcmp.eq.s32.totalorder %v191, %v198
        %vm280 = vcmp.eq.s32.totalorder %v192, %v198
        %vm281 = vcmp.eq.s32.totalorder %v185, %v201
        %vm282 = vcmp.eq.s32.totalorder %v186, %v201
        %vm283 = vcmp.eq.s32.totalorder %v187, %v201
        %vm284 = vcmp.eq.s32.totalorder %v188, %v201
        %vm285 = vcmp.eq.s32.totalorder %v189, %v201
        %vm286 = vcmp.eq.s32.totalorder %v190, %v201
        %vm287 = vcmp.eq.s32.totalorder %v191, %v201
        %vm288 = vcmp.eq.s32.totalorder %v192, %v201
        %vm289 = vcmp.eq.s32.totalorder %v185, %v204
        %vm290 = vcmp.eq.s32.totalorder %v186, %v204
        %vm291 = vcmp.eq.s32.totalorder %v187, %v204
        %vm292 = vcmp.eq.s32.totalorder %v188, %v204
        %vm293 = vcmp.eq.s32.totalorder %v189, %v204
        %vm294 = vcmp.eq.s32.totalorder %v190, %v204
        %vm295 = vcmp.eq.s32.totalorder %v191, %v204
        %vm296 = vcmp.eq.s32.totalorder %v192, %v204
        %vm297 = vcmp.eq.s32.totalorder %v185, %v207
        %vm298 = vcmp.eq.s32.totalorder %v186, %v207
        %vm299 = vcmp.eq.s32.totalorder %v187, %v207
        %vm300 = vcmp.eq.s32.totalorder %v188, %v207
        %vm301 = vcmp.eq.s32.totalorder %v189, %v207
        %vm302 = vcmp.eq.s32.totalorder %v190, %v207
        %vm303 = vcmp.eq.s32.totalorder %v191, %v207
        %vm304 = vcmp.eq.s32.totalorder %v192, %v207
        %vm305 = vcmp.eq.s32.totalorder %v185, %v210
        %vm306 = vcmp.eq.s32.totalorder %v186, %v210
        %vm307 = vcmp.eq.s32.totalorder %v187, %v210
        %vm308 = vcmp.eq.s32.totalorder %v188, %v210
        %vm309 = vcmp.eq.s32.totalorder %v189, %v210
        %vm310 = vcmp.eq.s32.totalorder %v190, %v210
        %vm311 = vcmp.eq.s32.totalorder %v191, %v210
        %vm312 = vcmp.eq.s32.totalorder %v192, %v210
        %vm313 = vcmp.eq.s32.totalorder %v185, %v213
        %vm314 = vcmp.eq.s32.totalorder %v186, %v213
        %vm315 = vcmp.eq.s32.totalorder %v187, %v213
        %vm316 = vcmp.eq.s32.totalorder %v188, %v213
        %vm317 = vcmp.eq.s32.totalorder %v189, %v213
        %vm318 = vcmp.eq.s32.totalorder %v190, %v213
        %vm319 = vcmp.eq.s32.totalorder %v191, %v213
        %vm320 = vcmp.eq.s32.totalorder %v192, %v213
        %vm321 = vcmp.eq.s32.totalorder %v185, %v216
        %vm322 = vcmp.eq.s32.totalorder %v186, %v216
        %vm323 = vcmp.eq.s32.totalorder %v187, %v216
        %vm324 = vcmp.eq.s32.totalorder %v188, %v216
        %vm325 = vcmp.eq.s32.totalorder %v189, %v216
        %vm326 = vcmp.eq.s32.totalorder %v190, %v216
        %vm327 = vcmp.eq.s32.totalorder %v191, %v216
        %vm328 = vcmp.eq.s32.totalorder %v192, %v216
        %vm329 = vcmp.eq.s32.totalorder %v185, %v219
        %vm330 = vcmp.eq.s32.totalorder %v186, %v219
        %vm331 = vcmp.eq.s32.totalorder %v187, %v219
        %vm332 = vcmp.eq.s32.totalorder %v188, %v219
        %vm333 = vcmp.eq.s32.totalorder %v189, %v219
        %vm334 = vcmp.eq.s32.totalorder %v190, %v219
        %vm335 = vcmp.eq.s32.totalorder %v191, %v219
        %vm336 = vcmp.eq.s32.totalorder %v192, %v219
        %vm337 = vcmp.eq.s32.totalorder %v185, %v222
        %vm338 = vcmp.eq.s32.totalorder %v186, %v222
        %vm339 = vcmp.eq.s32.totalorder %v187, %v222
        %vm340 = vcmp.eq.s32.totalorder %v188, %v222
        %vm341 = vcmp.eq.s32.totalorder %v189, %v222
        %vm342 = vcmp.eq.s32.totalorder %v190, %v222
        %vm343 = vcmp.eq.s32.totalorder %v191, %v222
        %vm344 = vcmp.eq.s32.totalorder %v192, %v222
        %vm345 = vcmp.eq.s32.totalorder %v185, %v225
        %vm346 = vcmp.eq.s32.totalorder %v186, %v225
        %vm347 = vcmp.eq.s32.totalorder %v187, %v225
        %vm348 = vcmp.eq.s32.totalorder %v188, %v225
        %vm349 = vcmp.eq.s32.totalorder %v189, %v225
        %vm350 = vcmp.eq.s32.totalorder %v190, %v225
        %vm351 = vcmp.eq.s32.totalorder %v191, %v225
        %vm352 = vcmp.eq.s32.totalorder %v192, %v225
        %vm353 = vcmp.eq.s32.totalorder %v185, %v228
        %vm354 = vcmp.eq.s32.totalorder %v186, %v228
        %vm355 = vcmp.eq.s32.totalorder %v187, %v228
        %vm356 = vcmp.eq.s32.totalorder %v188, %v228
        %vm357 = vcmp.eq.s32.totalorder %v189, %v228
        %vm358 = vcmp.eq.s32.totalorder %v190, %v228
        %vm359 = vcmp.eq.s32.totalorder %v191, %v228
        %vm360 = vcmp.eq.s32.totalorder %v192, %v228
        %vm361 = vcmp.eq.s32.totalorder %v185, %v231
        %vm362 = vcmp.eq.s32.totalorder %v186, %v231
        %vm363 = vcmp.eq.s32.totalorder %v187, %v231
        %vm364 = vcmp.eq.s32.totalorder %v188, %v231
        %vm365 = vcmp.eq.s32.totalorder %v189, %v231
        %vm366 = vcmp.eq.s32.totalorder %v190, %v231
        %vm367 = vcmp.eq.s32.totalorder %v191, %v231
        %vm368 = vcmp.eq.s32.totalorder %v192, %v231
        %vm369 = vcmp.eq.s32.totalorder %v185, %v234
        %vm370 = vcmp.eq.s32.totalorder %v186, %v234
        %vm371 = vcmp.eq.s32.totalorder %v187, %v234
        %vm372 = vcmp.eq.s32.totalorder %v188, %v234
        %vm373 = vcmp.eq.s32.totalorder %v189, %v234
        %vm374 = vcmp.eq.s32.totalorder %v190, %v234
        %vm375 = vcmp.eq.s32.totalorder %v191, %v234
        %vm376 = vcmp.eq.s32.totalorder %v192, %v234
        %vm377 = vcmp.eq.s32.totalorder %v185, %v237
        %vm378 = vcmp.eq.s32.totalorder %v186, %v237
        %vm379 = vcmp.eq.s32.totalorder %v187, %v237
        %vm380 = vcmp.eq.s32.totalorder %v188, %v237
        %vm381 = vcmp.eq.s32.totalorder %v189, %v237
        %vm382 = vcmp.eq.s32.totalorder %v190, %v237
        %vm383 = vcmp.eq.s32.totalorder %v191, %v237
        %vm384 = vcmp.eq.s32.totalorder %v192, %v237
        %vm385 = vcmp.eq.s32.totalorder %v185, %v240
        %vm386 = vcmp.eq.s32.totalorder %v186, %v240
        %vm387 = vcmp.eq.s32.totalorder %v187, %v240
        %vm388 = vcmp.eq.s32.totalorder %v188, %v240
        %vm389 = vcmp.eq.s32.totalorder %v189, %v240
        %vm390 = vcmp.eq.s32.totalorder %v190, %v240
        %vm391 = vcmp.eq.s32.totalorder %v191, %v240
        %vm392 = vcmp.eq.s32.totalorder %v192, %v240
        %vm393 = vcmp.eq.s32.totalorder %v185, %v243
        %vm394 = vcmp.eq.s32.totalorder %v186, %v243
        %vm395 = vcmp.eq.s32.totalorder %v187, %v243
        %vm396 = vcmp.eq.s32.totalorder %v188, %v243
        %vm397 = vcmp.eq.s32.totalorder %v189, %v243
        %vm398 = vcmp.eq.s32.totalorder %v190, %v243
        %vm399 = vcmp.eq.s32.totalorder %v191, %v243
        %vm400 = vcmp.eq.s32.totalorder %v192, %v243
        %vm401 = vcmp.eq.s32.totalorder %v185, %v246
        %vm402 = vcmp.eq.s32.totalorder %v186, %v246
        %vm403 = vcmp.eq.s32.totalorder %v187, %v246
        %vm404 = vcmp.eq.s32.totalorder %v188, %v246
        %vm405 = vcmp.eq.s32.totalorder %v189, %v246
        %vm406 = vcmp.eq.s32.totalorder %v190, %v246
        %vm407 = vcmp.eq.s32.totalorder %v191, %v246
        %vm408 = vcmp.eq.s32.totalorder %v192, %v246
        %vm409 = vcmp.eq.s32.totalorder %v185, %v249
        %vm410 = vcmp.eq.s32.totalorder %v186, %v249
        %vm411 = vcmp.eq.s32.totalorder %v187, %v249
        %vm412 = vcmp.eq.s32.totalorder %v188, %v249
        %vm413 = vcmp.eq.s32.totalorder %v189, %v249
        %vm414 = vcmp.eq.s32.totalorder %v190, %v249
        %vm415 = vcmp.eq.s32.totalorder %v191, %v249
        %vm416 = vcmp.eq.s32.totalorder %v192, %v249
        %vm417 = vcmp.eq.s32.totalorder %v185, %v252
        %vm418 = vcmp.eq.s32.totalorder %v186, %v252
        %vm419 = vcmp.eq.s32.totalorder %v187, %v252
        %vm420 = vcmp.eq.s32.totalorder %v188, %v252
        %vm421 = vcmp.eq.s32.totalorder %v189, %v252
        %vm422 = vcmp.eq.s32.totalorder %v190, %v252
        %vm423 = vcmp.eq.s32.totalorder %v191, %v252
        %vm424 = vcmp.eq.s32.totalorder %v192, %v252
        %vm425 = vcmp.eq.s32.totalorder %v185, %v255
        %vm426 = vcmp.eq.s32.totalorder %v186, %v255
        %vm427 = vcmp.eq.s32.totalorder %v187, %v255
        %vm428 = vcmp.eq.s32.totalorder %v188, %v255
        %vm429 = vcmp.eq.s32.totalorder %v189, %v255
        %vm430 = vcmp.eq.s32.totalorder %v190, %v255
        %vm431 = vcmp.eq.s32.totalorder %v191, %v255
        %vm432 = vcmp.eq.s32.totalorder %v192, %v255
        %vm433 = vcmp.eq.s32.totalorder %v185, %v258
        %vm434 = vcmp.eq.s32.totalorder %v186, %v258
        %vm435 = vcmp.eq.s32.totalorder %v187, %v258
        %vm436 = vcmp.eq.s32.totalorder %v188, %v258
        %vm437 = vcmp.eq.s32.totalorder %v189, %v258
        %vm438 = vcmp.eq.s32.totalorder %v190, %v258
        %vm439 = vcmp.eq.s32.totalorder %v191, %v258
        %vm440 = vcmp.eq.s32.totalorder %v192, %v258
        %vm441 = vcmp.eq.s32.totalorder %v185, %v261
        %vm442 = vcmp.eq.s32.totalorder %v186, %v261
        %vm443 = vcmp.eq.s32.totalorder %v187, %v261
        %vm444 = vcmp.eq.s32.totalorder %v188, %v261
        %vm445 = vcmp.eq.s32.totalorder %v189, %v261
        %vm446 = vcmp.eq.s32.totalorder %v190, %v261
        %vm447 = vcmp.eq.s32.totalorder %v191, %v261
        %vm448 = vcmp.eq.s32.totalorder %v192, %v261
        %vm449 = vcmp.eq.s32.totalorder %v185, %v264
        %vm450 = vcmp.eq.s32.totalorder %v186, %v264
        %vm451 = vcmp.eq.s32.totalorder %v187, %v264
        %vm452 = vcmp.eq.s32.totalorder %v188, %v264
        %vm453 = vcmp.eq.s32.totalorder %v189, %v264
        %vm454 = vcmp.eq.s32.totalorder %v190, %v264
        %vm455 = vcmp.eq.s32.totalorder %v191, %v264
        %vm456 = vcmp.eq.s32.totalorder %v192, %v264
        %v457 = vsel %vm265, 1, 0
        %v458 = vsel %vm266, 1, 0
        %v459 = vsel %vm267, 1, 0
        %v460 = vsel %vm268, 1, 0
        %v461 = vsel %vm269, 1, 0
        %v462 = vsel %vm270, 1, 0
        %v463 = vsel %vm271, 1, 0
        %v464 = vsel %vm272, 1, 0
        %v465 = vsel %vm273, 1, 0
        %v466 = vsel %vm274, 1, 0
        %v467 = vsel %vm275, 1, 0
        %v468 = vsel %vm276, 1, 0
        %v469 = vsel %vm277, 1, 0
        %v470 = vsel %vm278, 1, 0
        %v471 = vsel %vm279, 1, 0
        %v472 = vsel %vm280, 1, 0
        %v473 = vsel %vm281, 1, 0
        %v474 = vsel %vm282, 1, 0
        %v475 = vsel %vm283, 1, 0
        %v476 = vsel %vm284, 1, 0
        %v477 = vsel %vm285, 1, 0
        %v478 = vsel %vm286, 1, 0
        %v479 = vsel %vm287, 1, 0
        %v480 = vsel %vm288, 1, 0
        %v481 = vsel %vm289, 1, 0
        %v482 = vsel %vm290, 1, 0
        %v483 = vsel %vm291, 1, 0
        %v484 = vsel %vm292, 1, 0
        %v485 = vsel %vm293, 1, 0
        %v486 = vsel %vm294, 1, 0
        %v487 = vsel %vm295, 1, 0
        %v488 = vsel %vm296, 1, 0
        %v489 = vsel %vm297, 1, 0
        %v490 = vsel %vm298, 1, 0
        %v491 = vsel %vm299, 1, 0
        %v492 = vsel %vm300, 1, 0
        %v493 = vsel %vm301, 1, 0
        %v494 = vsel %vm302, 1, 0
        %v495 = vsel %vm303, 1, 0
        %v496 = vsel %vm304, 1, 0
        %v497 = vsel %vm305, 1, 0
        %v498 = vsel %vm306, 1, 0
        %v499 = vsel %vm307, 1, 0
        %v500 = vsel %vm308, 1, 0
        %v501 = vsel %vm309, 1, 0
        %v502 = vsel %vm310, 1, 0
        %v503 = vsel %vm311, 1, 0
        %v504 = vsel %vm312, 1, 0
        %v505 = vsel %vm313, 1, 0
        %v506 = vsel %vm314, 1, 0
        %v507 = vsel %vm315, 1, 0
        %v508 = vsel %vm316, 1, 0
        %v509 = vsel %vm317, 1, 0
        %v510 = vsel %vm318, 1, 0
        %v511 = vsel %vm319, 1, 0
        %v512 = vsel %vm320, 1, 0
        %v513 = vsel %vm321, 1, 0
        %v514 = vsel %vm322, 1, 0
        %v515 = vsel %vm323, 1, 0
        %v516 = vsel %vm324, 1, 0
        %v517 = vsel %vm325, 1, 0
        %v518 = vsel %vm326, 1, 0
        %v519 = vsel %vm327, 1, 0
        %v520 = vsel %vm328, 1, 0
        %v521 = vsel %vm329, 1, 0
        %v522 = vsel %vm330, 1, 0
        %v523 = vsel %vm331, 1, 0
        %v524 = vsel %vm332, 1, 0
        %v525 = vsel %vm333, 1, 0
        %v526 = vsel %vm334, 1, 0
        %v527 = vsel %vm335, 1, 0
        %v528 = vsel %vm336, 1, 0
        %v529 = vsel %vm337, 1, 0
        %v530 = vsel %vm338, 1, 0
        %v531 = vsel %vm339, 1, 0
        %v532 = vsel %vm340, 1, 0
        %v533 = vsel %vm341, 1, 0
        %v534 = vsel %vm342, 1, 0
        %v535 = vsel %vm343, 1, 0
        %v536 = vsel %vm344, 1, 0
        %v537 = vsel %vm345, 1, 0
        %v538 = vsel %vm346, 1, 0
        %v539 = vsel %vm347, 1, 0
        %v540 = vsel %vm348, 1, 0
        %v541 = vsel %vm349, 1, 0
        %v542 = vsel %vm350, 1, 0
        %v543 = vsel %vm351, 1, 0
        %v544 = vsel %vm352, 1, 0
        %v545 = vsel %vm353, 1, 0
        %v546 = vsel %vm354, 1, 0
        %v547 = vsel %vm355, 1, 0
        %v548 = vsel %vm356, 1, 0
        %v549 = vsel %vm357, 1, 0
        %v550 = vsel %vm358, 1, 0
        %v551 = vsel %vm359, 1, 0
        %v552 = vsel %vm360, 1, 0
        %v553 = vsel %vm361, 1, 0
        %v554 = vsel %vm362, 1, 0
        %v555 = vsel %vm363, 1, 0
        %v556 = vsel %vm364, 1, 0
        %v557 = vsel %vm365, 1, 0
        %v558 = vsel %vm366, 1, 0
        %v559 = vsel %vm367, 1, 0
        %v560 = vsel %vm368, 1, 0
        %v561 = vsel %vm369, 1, 0
        %v562 = vsel %vm370, 1, 0
        %v563 = vsel %vm371, 1, 0
        %v564 = vsel %vm372, 1, 0
        %v565 = vsel %vm373, 1, 0
        %v566 = vsel %vm374, 1, 0
        %v567 = vsel %vm375, 1, 0
        %v568 = vsel %vm376, 1, 0
        %v569 = vsel %vm377, 1, 0
        %v570 = vsel %vm378, 1, 0
        %v571 = vsel %vm379, 1, 0
        %v572 = vsel %vm380, 1, 0
        %v573 = vsel %vm381, 1, 0
        %v574 = vsel %vm382, 1, 0
        %v575 = vsel %vm383, 1, 0
        %v576 = vsel %vm384, 1, 0
        %v577 = vsel %vm385, 1, 0
        %v578 = vsel %vm386, 1, 0
        %v579 = vsel %vm387, 1, 0
        %v580 = vsel %vm388, 1, 0
        %v581 = vsel %vm389, 1, 0
        %v582 = vsel %vm390, 1, 0
        %v583 = vsel %vm391, 1, 0
        %v584 = vsel %vm392, 1, 0
        %v585 = vsel %vm393, 1, 0
        %v586 = vsel %vm394, 1, 0
        %v587 = vsel %vm395, 1, 0
        %v588 = vsel %vm396, 1, 0
        %v589 = vsel %vm397, 1, 0
        %v590 = vsel %vm398, 1, 0
        %v591 = vsel %vm399, 1, 0
        %v592 = vsel %vm400, 1, 0
        %v593 = vsel %vm401, 1, 0
        %v594 = vsel %vm402, 1, 0
        %v595 = vsel %vm403, 1, 0
        %v596 = vsel %vm404, 1, 0
        %v597 = vsel %vm405, 1, 0
        %v598 = vsel %vm406, 1, 0
        %v599 = vsel %vm407, 1, 0
        %v600 = vsel %vm408, 1, 0
        %v601 = vsel %vm409, 1, 0
        %v602 = vsel %vm410, 1, 0
        %v603 = vsel %vm411, 1, 0
        %v604 = vsel %vm412, 1, 0
        %v605 = vsel %vm413, 1, 0
        %v606 = vsel %vm414, 1, 0
        %v607 = vsel %vm415, 1, 0
        %v608 = vsel %vm416, 1, 0
        %v609 = vsel %vm417, 1, 0
        %v610 = vsel %vm418, 1, 0
        %v611 = vsel %vm419, 1, 0
        %v612 = vsel %vm420, 1, 0
        %v613 = vsel %vm421, 1, 0
        %v614 = vsel %vm422, 1, 0
        %v615 = vsel %vm423, 1, 0
        %v616 = vsel %vm424, 1, 0
        %v617 = vsel %vm425, 1, 0
        %v618 = vsel %vm426, 1, 0
        %v619 = vsel %vm427, 1, 0
        %v620 = vsel %vm428, 1, 0
        %v621 = vsel %vm429, 1, 0
        %v622 = vsel %vm430, 1, 0
        %v623 = vsel %vm431, 1, 0
        %v624 = vsel %vm432, 1, 0
        %v625 = vsel %vm433, 1, 0
        %v626 = vsel %vm434, 1, 0
        %v627 = vsel %vm435, 1, 0
        %v628 = vsel %vm436, 1, 0
        %v629 = vsel %vm437, 1, 0
        %v630 = vsel %vm438, 1, 0
        %v631 = vsel %vm439, 1, 0
        %v632 = vsel %vm440, 1, 0
        %v633 = vsel %vm441, 1, 0
        %v634 = vsel %vm442, 1, 0
        %v635 = vsel %vm443, 1, 0
        %v636 = vsel %vm444, 1, 0
        %v637 = vsel %vm445, 1, 0
        %v638 = vsel %vm446, 1, 0
        %v639 = vsel %vm447, 1, 0
        %v640 = vsel %vm448, 1, 0
        %v641 = vsel %vm449, 1, 0
        %v642 = vsel %vm450, 1, 0
        %v643 = vsel %vm451, 1, 0
        %v644 = vsel %vm452, 1, 0
        %v645 = vsel %vm453, 1, 0
        %v646 = vsel %vm454, 1, 0
        %v647 = vsel %vm455, 1, 0
        %v648 = vsel %vm456, 1, 0
        %v649 = vcvt.s32.f32 %v457
        %v650 = vcvt.s32.f32 %v458
        %v651 = vcvt.s32.f32 %v459
        %v652 = vcvt.s32.f32 %v460
        %v653 = vcvt.s32.f32 %v461
        %v654 = vcvt.s32.f32 %v462
        %v655 = vcvt.s32.f32 %v463
        %v656 = vcvt.s32.f32 %v464
        %v657 = vcvt.s32.f32 %v465
        %v658 = vcvt.s32.f32 %v466
        %v659 = vcvt.s32.f32 %v467
        %v660 = vcvt.s32.f32 %v468
        %v661 = vcvt.s32.f32 %v469
        %v662 = vcvt.s32.f32 %v470
        %v663 = vcvt.s32.f32 %v471
        %v664 = vcvt.s32.f32 %v472
        %v665 = vcvt.s32.f32 %v473
        %v666 = vcvt.s32.f32 %v474
        %v667 = vcvt.s32.f32 %v475
        %v668 = vcvt.s32.f32 %v476
        %v669 = vcvt.s32.f32 %v477
        %v670 = vcvt.s32.f32 %v478
        %v671 = vcvt.s32.f32 %v479
        %v672 = vcvt.s32.f32 %v480
        %v673 = vcvt.s32.f32 %v481
        %v674 = vcvt.s32.f32 %v482
        %v675 = vcvt.s32.f32 %v483
        %v676 = vcvt.s32.f32 %v484
        %v677 = vcvt.s32.f32 %v485
        %v678 = vcvt.s32.f32 %v486
        %v679 = vcvt.s32.f32 %v487
        %v680 = vcvt.s32.f32 %v488
        %v681 = vcvt.s32.f32 %v489
        %v682 = vcvt.s32.f32 %v490
        %v683 = vcvt.s32.f32 %v491
        %v684 = vcvt.s32.f32 %v492
        %v685 = vcvt.s32.f32 %v493
        %v686 = vcvt.s32.f32 %v494
        %v687 = vcvt.s32.f32 %v495
        %v688 = vcvt.s32.f32 %v496
        %v689 = vcvt.s32.f32 %v497
        %v690 = vcvt.s32.f32 %v498
        %v691 = vcvt.s32.f32 %v499
        %v692 = vcvt.s32.f32 %v500
        %v693 = vcvt.s32.f32 %v501
        %v694 = vcvt.s32.f32 %v502
        %v695 = vcvt.s32.f32 %v503
        %v696 = vcvt.s32.f32 %v504
        %v697 = vcvt.s32.f32 %v505
        %v698 = vcvt.s32.f32 %v506
        %v699 = vcvt.s32.f32 %v507
        %v700 = vcvt.s32.f32 %v508
        %v701 = vcvt.s32.f32 %v509
        %v702 = vcvt.s32.f32 %v510
        %v703 = vcvt.s32.f32 %v511
        %v704 = vcvt.s32.f32 %v512
        %v705 = vcvt.s32.f32 %v513
        %v706 = vcvt.s32.f32 %v514
        %v707 = vcvt.s32.f32 %v515
        %v708 = vcvt.s32.f32 %v516
        %v709 = vcvt.s32.f32 %v517
        %v710 = vcvt.s32.f32 %v518
        %v711 = vcvt.s32.f32 %v519
        %v712 = vcvt.s32.f32 %v520
        %v713 = vcvt.s32.f32 %v521
        %v714 = vcvt.s32.f32 %v522
        %v715 = vcvt.s32.f32 %v523
        %v716 = vcvt.s32.f32 %v524
        %v717 = vcvt.s32.f32 %v525
        %v718 = vcvt.s32.f32 %v526
        %v719 = vcvt.s32.f32 %v527
        %v720 = vcvt.s32.f32 %v528
        %v721 = vcvt.s32.f32 %v529
        %v722 = vcvt.s32.f32 %v530
        %v723 = vcvt.s32.f32 %v531
        %v724 = vcvt.s32.f32 %v532
        %v725 = vcvt.s32.f32 %v533
        %v726 = vcvt.s32.f32 %v534
        %v727 = vcvt.s32.f32 %v535
        %v728 = vcvt.s32.f32 %v536
        %v729 = vcvt.s32.f32 %v537
        %v730 = vcvt.s32.f32 %v538
        %v731 = vcvt.s32.f32 %v539
        %v732 = vcvt.s32.f32 %v540
        %v733 = vcvt.s32.f32 %v541
        %v734 = vcvt.s32.f32 %v542
        %v735 = vcvt.s32.f32 %v543
        %v736 = vcvt.s32.f32 %v544
        %v737 = vcvt.s32.f32 %v545
        %v738 = vcvt.s32.f32 %v546
        %v739 = vcvt.s32.f32 %v547
        %v740 = vcvt.s32.f32 %v548
        %v741 = vcvt.s32.f32 %v549
        %v742 = vcvt.s32.f32 %v550
        %v743 = vcvt.s32.f32 %v551
        %v744 = vcvt.s32.f32 %v552
        %v745 = vcvt.s32.f32 %v553
        %v746 = vcvt.s32.f32 %v554
        %v747 = vcvt.s32.f32 %v555
        %v748 = vcvt.s32.f32 %v556
        %v749 = vcvt.s32.f32 %v557
        %v750 = vcvt.s32.f32 %v558
        %v751 = vcvt.s32.f32 %v559
        %v752 = vcvt.s32.f32 %v560
        %v753 = vcvt.s32.f32 %v561
        %v754 = vcvt.s32.f32 %v562
        %v755 = vcvt.s32.f32 %v563
        %v756 = vcvt.s32.f32 %v564
        %v757 = vcvt.s32.f32 %v565
        %v758 = vcvt.s32.f32 %v566
        %v759 = vcvt.s32.f32 %v567
        %v760 = vcvt.s32.f32 %v568
        %v761 = vcvt.s32.f32 %v569
        %v762 = vcvt.s32.f32 %v570
        %v763 = vcvt.s32.f32 %v571
        %v764 = vcvt.s32.f32 %v572
        %v765 = vcvt.s32.f32 %v573
        %v766 = vcvt.s32.f32 %v574
        %v767 = vcvt.s32.f32 %v575
        %v768 = vcvt.s32.f32 %v576
        %v769 = vcvt.s32.f32 %v577
        %v770 = vcvt.s32.f32 %v578
        %v771 = vcvt.s32.f32 %v579
        %v772 = vcvt.s32.f32 %v580
        %v773 = vcvt.s32.f32 %v581
        %v774 = vcvt.s32.f32 %v582
        %v775 = vcvt.s32.f32 %v583
        %v776 = vcvt.s32.f32 %v584
        %v777 = vcvt.s32.f32 %v585
        %v778 = vcvt.s32.f32 %v586
        %v779 = vcvt.s32.f32 %v587
        %v780 = vcvt.s32.f32 %v588
        %v781 = vcvt.s32.f32 %v589
        %v782 = vcvt.s32.f32 %v590
        %v783 = vcvt.s32.f32 %v591
        %v784 = vcvt.s32.f32 %v592
        %v785 = vcvt.s32.f32 %v593
        %v786 = vcvt.s32.f32 %v594
        %v787 = vcvt.s32.f32 %v595
        %v788 = vcvt.s32.f32 %v596
        %v789 = vcvt.s32.f32 %v597
        %v790 = vcvt.s32.f32 %v598
        %v791 = vcvt.s32.f32 %v599
        %v792 = vcvt.s32.f32 %v600
        %v793 = vcvt.s32.f32 %v601
        %v794 = vcvt.s32.f32 %v602
        %v795 = vcvt.s32.f32 %v603
        %v796 = vcvt.s32.f32 %v604
        %v797 = vcvt.s32.f32 %v605
        %v798 = vcvt.s32.f32 %v606
        %v799 = vcvt.s32.f32 %v607
        %v800 = vcvt.s32.f32 %v608
        %v801 = vcvt.s32.f32 %v609
        %v802 = vcvt.s32.f32 %v610
        %v803 = vcvt.s32.f32 %v611
        %v804 = vcvt.s32.f32 %v612
        %v805 = vcvt.s32.f32 %v613
        %v806 = vcvt.s32.f32 %v614
        %v807 = vcvt.s32.f32 %v615
        %v808 = vcvt.s32.f32 %v616
        %v809 = vcvt.s32.f32 %v617
        %v810 = vcvt.s32.f32 %v618
        %v811 = vcvt.s32.f32 %v619
        %v812 = vcvt.s32.f32 %v620
        %v813 = vcvt.s32.f32 %v621
        %v814 = vcvt.s32.f32 %v622
        %v815 = vcvt.s32.f32 %v623
        %v816 = vcvt.s32.f32 %v624
        %v817 = vcvt.s32.f32 %v625
        %v818 = vcvt.s32.f32 %v626
        %v819 = vcvt.s32.f32 %v627
        %v820 = vcvt.s32.f32 %v628
        %v821 = vcvt.s32.f32 %v629
        %v822 = vcvt.s32.f32 %v630
        %v823 = vcvt.s32.f32 %v631
        %v824 = vcvt.s32.f32 %v632
        %v825 = vcvt.s32.f32 %v633
        %v826 = vcvt.s32.f32 %v634
        %v827 = vcvt.s32.f32 %v635
        %v828 = vcvt.s32.f32 %v636
        %v829 = vcvt.s32.f32 %v637
        %v830 = vcvt.s32.f32 %v638
        %v831 = vcvt.s32.f32 %v639
        %v832 = vcvt.s32.f32 %v640
        %v833 = vcvt.s32.f32 %v641
        %v834 = vcvt.s32.f32 %v642
        %v835 = vcvt.s32.f32 %v643
        %v836 = vcvt.s32.f32 %v644
        %v837 = vcvt.s32.f32 %v645
        %v838 = vcvt.s32.f32 %v646
        %v839 = vcvt.s32.f32 %v647
        %v840 = vcvt.s32.f32 %v648
        %v841 = vld [vmem:[#allocation2] sm:$0xff]
        %v842 = vld [vmem:[#allocation2 + $0x8] sm:$0xff]
        %v843 = vld [vmem:[#allocation2 + $0x10] sm:$0xff]
        %v844 = vld [vmem:[#allocation2 + $0x18] sm:$0xff]
        %v845 = vld [vmem:[#allocation2 + $0x20] sm:$0xff]
        %v846 = vld [vmem:[#allocation2 + $0x28] sm:$0xff]
        %v847 = vld [vmem:[#allocation2 + $0x30] sm:$0xff]
        %v848 = vld [vmem:[#allocation2 + $0x38] sm:$0xff]
        %v849 = vld [vmem:[#allocation2 + $0x40] sm:$0xff]
        %v850 = vld [vmem:[#allocation2 + $0x48] sm:$0xff]
        %v851 = vld [vmem:[#allocation2 + $0x50] sm:$0xff]
        %v852 = vld [vmem:[#allocation2 + $0x58] sm:$0xff]
        %v853 = vld [vmem:[#allocation2 + $0x60] sm:$0xff]
        %v854 = vld [vmem:[#allocation2 + $0x68] sm:$0xff]
        %v855 = vld [vmem:[#allocation2 + $0x70] sm:$0xff]
        %v856 = vld [vmem:[#allocation2 + $0x78] sm:$0xff]
        %v857 = vld [vmem:[#allocation2 + $0x80] sm:$0xff]
        %v858 = vld [vmem:[#allocation2 + $0x88] sm:$0xff]
        %v859 = vld [vmem:[#allocation2 + $0x90] sm:$0xff]
        %v860 = vld [vmem:[#allocation2 + $0x98] sm:$0xff]
        %v861 = vld [vmem:[#allocation2 + $0xa0] sm:$0xff]
        %v862 = vld [vmem:[#allocation2 + $0xa8] sm:$0xff]
        %v863 = vld [vmem:[#allocation2 + $0xb0] sm:$0xff]
        %v864 = vld [vmem:[#allocation2 + $0xb8] sm:$0xff]
        %v865 = vld [vmem:[#allocation2 + $0xc0] sm:$0xff]
        %v866 = vld [vmem:[#allocation2 + $0xc8] sm:$0xff]
        %v867 = vld [vmem:[#allocation2 + $0xd0] sm:$0xff]
        %v868 = vld [vmem:[#allocation2 + $0xd8] sm:$0xff]
        %v869 = vld [vmem:[#allocation2 + $0xe0] sm:$0xff]
        %v870 = vld [vmem:[#allocation2 + $0xe8] sm:$0xff]
        %v871 = vld [vmem:[#allocation2 + $0xf0] sm:$0xff]
        %v872 = vld [vmem:[#allocation2 + $0xf8] sm:$0xff]
        %v873 = vld [vmem:[#allocation2 + $0x100] sm:$0xff]
        %v874 = vld [vmem:[#allocation2 + $0x108] sm:$0xff]
        %v875 = vld [vmem:[#allocation2 + $0x110] sm:$0xff]
        %v876 = vld [vmem:[#allocation2 + $0x118] sm:$0xff]
        %v877 = vld [vmem:[#allocation2 + $0x120] sm:$0xff]
        %v878 = vld [vmem:[#allocation2 + $0x128] sm:$0xff]
        %v879 = vld [vmem:[#allocation2 + $0x130] sm:$0xff]
        %v880 = vld [vmem:[#allocation2 + $0x138] sm:$0xff]
        %v881 = vld [vmem:[#allocation2 + $0x140] sm:$0xff]
        %v882 = vld [vmem:[#allocation2 + $0x148] sm:$0xff]
        %v883 = vld [vmem:[#allocation2 + $0x150] sm:$0xff]
        %v884 = vld [vmem:[#allocation2 + $0x158] sm:$0xff]
        %v885 = vld [vmem:[#allocation2 + $0x160] sm:$0xff]
        %v886 = vld [vmem:[#allocation2 + $0x168] sm:$0xff]
        %v887 = vld [vmem:[#allocation2 + $0x170] sm:$0xff]
        %v888 = vld [vmem:[#allocation2 + $0x178] sm:$0xff]
        %v889 = vld [vmem:[#allocation2 + $0x180] sm:$0xff]
        %v890 = vld [vmem:[#allocation2 + $0x188] sm:$0xff]
        %v891 = vld [vmem:[#allocation2 + $0x190] sm:$0xff]
        %v892 = vld [vmem:[#allocation2 + $0x198] sm:$0xff]
        %v893 = vld [vmem:[#allocation2 + $0x1a0] sm:$0xff]
        %v894 = vld [vmem:[#allocation2 + $0x1a8] sm:$0xff]
        %v895 = vld [vmem:[#allocation2 + $0x1b0] sm:$0xff]
        %v896 = vld [vmem:[#allocation2 + $0x1b8] sm:$0xff]
        %v897 = vld [vmem:[#allocation2 + $0x1c0] sm:$0xff]
        %v898 = vld [vmem:[#allocation2 + $0x1c8] sm:$0xff]
        %v899 = vld [vmem:[#allocation2 + $0x1d0] sm:$0xff]
        %v900 = vld [vmem:[#allocation2 + $0x1d8] sm:$0xff]
        %v901 = vld [vmem:[#allocation2 + $0x1e0] sm:$0xff]
        %v902 = vld [vmem:[#allocation2 + $0x1e8] sm:$0xff]
        %v903 = vld [vmem:[#allocation2 + $0x1f0] sm:$0xff]
        %v904 = vld [vmem:[#allocation2 + $0x1f8] sm:$0xff]
        %v905 = vld [vmem:[#allocation2 + $0x200] sm:$0xff]
        %v906 = vld [vmem:[#allocation2 + $0x208] sm:$0xff]
        %v907 = vld [vmem:[#allocation2 + $0x210] sm:$0xff]
        %v908 = vld [vmem:[#allocation2 + $0x218] sm:$0xff]
        %v909 = vld [vmem:[#allocation2 + $0x220] sm:$0xff]
        %v910 = vld [vmem:[#allocation2 + $0x228] sm:$0xff]
        %v911 = vld [vmem:[#allocation2 + $0x230] sm:$0xff]
        %v912 = vld [vmem:[#allocation2 + $0x238] sm:$0xff]
        %v913 = vld [vmem:[#allocation2 + $0x240] sm:$0xff]
        %v914 = vld [vmem:[#allocation2 + $0x248] sm:$0xff]
        %v915 = vld [vmem:[#allocation2 + $0x250] sm:$0xff]
        %v916 = vld [vmem:[#allocation2 + $0x258] sm:$0xff]
        %v917 = vld [vmem:[#allocation2 + $0x260] sm:$0xff]
        %v918 = vld [vmem:[#allocation2 + $0x268] sm:$0xff]
        %v919 = vld [vmem:[#allocation2 + $0x270] sm:$0xff]
        %v920 = vld [vmem:[#allocation2 + $0x278] sm:$0xff]
        %v921 = vld [vmem:[#allocation2 + $0x280] sm:$0xff]
        %v922 = vld [vmem:[#allocation2 + $0x288] sm:$0xff]
        %v923 = vld [vmem:[#allocation2 + $0x290] sm:$0xff]
        %v924 = vld [vmem:[#allocation2 + $0x298] sm:$0xff]
        %v925 = vld [vmem:[#allocation2 + $0x2a0] sm:$0xff]
        %v926 = vld [vmem:[#allocation2 + $0x2a8] sm:$0xff]
        %v927 = vld [vmem:[#allocation2 + $0x2b0] sm:$0xff]
        %v928 = vld [vmem:[#allocation2 + $0x2b8] sm:$0xff]
        %v929 = vld [vmem:[#allocation2 + $0x2c0] sm:$0xff]
        %v930 = vld [vmem:[#allocation2 + $0x2c8] sm:$0xff]
        %v931 = vld [vmem:[#allocation2 + $0x2d0] sm:$0xff]
        %v932 = vld [vmem:[#allocation2 + $0x2d8] sm:$0xff]
        %v933 = vld [vmem:[#allocation2 + $0x2e0] sm:$0xff]
        %v934 = vld [vmem:[#allocation2 + $0x2e8] sm:$0xff]
        %v935 = vld [vmem:[#allocation2 + $0x2f0] sm:$0xff]
        %v936 = vld [vmem:[#allocation2 + $0x2f8] sm:$0xff]
        %v937 = vld [vmem:[#allocation2 + $0x300] sm:$0xff]
        %v938 = vld [vmem:[#allocation2 + $0x308] sm:$0xff]
        %v939 = vld [vmem:[#allocation2 + $0x310] sm:$0xff]
        %v940 = vld [vmem:[#allocation2 + $0x318] sm:$0xff]
        %v941 = vld [vmem:[#allocation2 + $0x320] sm:$0xff]
        %v942 = vld [vmem:[#allocation2 + $0x328] sm:$0xff]
        %v943 = vld [vmem:[#allocation2 + $0x330] sm:$0xff]
        %v944 = vld [vmem:[#allocation2 + $0x338] sm:$0xff]
        %v945 = vld [vmem:[#allocation2 + $0x340] sm:$0xff]
        %v946 = vld [vmem:[#allocation2 + $0x348] sm:$0xff]
        %v947 = vld [vmem:[#allocation2 + $0x350] sm:$0xff]
        %v948 = vld [vmem:[#allocation2 + $0x358] sm:$0xff]
        %v949 = vld [vmem:[#allocation2 + $0x360] sm:$0xff]
        %v950 = vld [vmem:[#allocation2 + $0x368] sm:$0xff]
        %v951 = vld [vmem:[#allocation2 + $0x370] sm:$0xff]
        %v952 = vld [vmem:[#allocation2 + $0x378] sm:$0xff]
        %v953 = vld [vmem:[#allocation2 + $0x380] sm:$0xff]
        %v954 = vld [vmem:[#allocation2 + $0x388] sm:$0xff]
        %v955 = vld [vmem:[#allocation2 + $0x390] sm:$0xff]
        %v956 = vld [vmem:[#allocation2 + $0x398] sm:$0xff]
        %v957 = vld [vmem:[#allocation2 + $0x3a0] sm:$0xff]
        %v958 = vld [vmem:[#allocation2 + $0x3a8] sm:$0xff]
        %v959 = vld [vmem:[#allocation2 + $0x3b0] sm:$0xff]
        %v960 = vld [vmem:[#allocation2 + $0x3b8] sm:$0xff]
        %v961 = vld [vmem:[#allocation2 + $0x3c0] sm:$0xff]
        %v962 = vld [vmem:[#allocation2 + $0x3c8] sm:$0xff]
        %v963 = vld [vmem:[#allocation2 + $0x3d0] sm:$0xff]
        %v964 = vld [vmem:[#allocation2 + $0x3d8] sm:$0xff]
        %v965 = vld [vmem:[#allocation2 + $0x3e0] sm:$0xff]
        %v966 = vld [vmem:[#allocation2 + $0x3e8] sm:$0xff]
        %v967 = vld [vmem:[#allocation2 + $0x3f0] sm:$0xff]
        %v968 = vld [vmem:[#allocation2 + $0x3f8] sm:$0xff]
        %v969 = vld [vmem:[#allocation2 + $0x400] sm:$0xff]
        %v970 = vld [vmem:[#allocation2 + $0x408] sm:$0xff]
        %v971 = vld [vmem:[#allocation2 + $0x410] sm:$0xff]
        %v972 = vld [vmem:[#allocation2 + $0x418] sm:$0xff]
        %v973 = vld [vmem:[#allocation2 + $0x420] sm:$0xff]
        %v974 = vld [vmem:[#allocation2 + $0x428] sm:$0xff]
        %v975 = vld [vmem:[#allocation2 + $0x430] sm:$0xff]
        %v976 = vld [vmem:[#allocation2 + $0x438] sm:$0xff]
        %v977 = vld [vmem:[#allocation2 + $0x440] sm:$0xff]
        %v978 = vld [vmem:[#allocation2 + $0x448] sm:$0xff]
        %v979 = vld [vmem:[#allocation2 + $0x450] sm:$0xff]
        %v980 = vld [vmem:[#allocation2 + $0x458] sm:$0xff]
        %v981 = vld [vmem:[#allocation2 + $0x460] sm:$0xff]
        %v982 = vld [vmem:[#allocation2 + $0x468] sm:$0xff]
        %v983 = vld [vmem:[#allocation2 + $0x470] sm:$0xff]
        %v984 = vld [vmem:[#allocation2 + $0x478] sm:$0xff]
        %v985 = vld [vmem:[#allocation2 + $0x480] sm:$0xff]
        %v986 = vld [vmem:[#allocation2 + $0x488] sm:$0xff]
        %v987 = vld [vmem:[#allocation2 + $0x490] sm:$0xff]
        %v988 = vld [vmem:[#allocation2 + $0x498] sm:$0xff]
        %v989 = vld [vmem:[#allocation2 + $0x4a0] sm:$0xff]
        %v990 = vld [vmem:[#allocation2 + $0x4a8] sm:$0xff]
        %v991 = vld [vmem:[#allocation2 + $0x4b0] sm:$0xff]
        %v992 = vld [vmem:[#allocation2 + $0x4b8] sm:$0xff]
        %v993 = vld [vmem:[#allocation2 + $0x4c0] sm:$0xff]
        %v994 = vld [vmem:[#allocation2 + $0x4c8] sm:$0xff]
        %v995 = vld [vmem:[#allocation2 + $0x4d0] sm:$0xff]
        %v996 = vld [vmem:[#allocation2 + $0x4d8] sm:$0xff]
        %v997 = vld [vmem:[#allocation2 + $0x4e0] sm:$0xff]
        %v998 = vld [vmem:[#allocation2 + $0x4e8] sm:$0xff]
        %v999 = vld [vmem:[#allocation2 + $0x4f0] sm:$0xff]
        %v1000 = vld [vmem:[#allocation2 + $0x4f8] sm:$0xff]
        %v1001 = vld [vmem:[#allocation2 + $0x500] sm:$0xff]
        %v1002 = vld [vmem:[#allocation2 + $0x508] sm:$0xff]
        %v1003 = vld [vmem:[#allocation2 + $0x510] sm:$0xff]
        %v1004 = vld [vmem:[#allocation2 + $0x518] sm:$0xff]
        %v1005 = vld [vmem:[#allocation2 + $0x520] sm:$0xff]
        %v1006 = vld [vmem:[#allocation2 + $0x528] sm:$0xff]
        %v1007 = vld [vmem:[#allocation2 + $0x530] sm:$0xff]
        %v1008 = vld [vmem:[#allocation2 + $0x538] sm:$0xff]
        %v1009 = vld [vmem:[#allocation2 + $0x540] sm:$0xff]
        %v1010 = vld [vmem:[#allocation2 + $0x548] sm:$0xff]
        %v1011 = vld [vmem:[#allocation2 + $0x550] sm:$0xff]
        %v1012 = vld [vmem:[#allocation2 + $0x558] sm:$0xff]
        %v1013 = vld [vmem:[#allocation2 + $0x560] sm:$0xff]
        %v1014 = vld [vmem:[#allocation2 + $0x568] sm:$0xff]
        %v1015 = vld [vmem:[#allocation2 + $0x570] sm:$0xff]
        %v1016 = vld [vmem:[#allocation2 + $0x578] sm:$0xff]
        %v1017 = vld [vmem:[#allocation2 + $0x580] sm:$0xff]
        %v1018 = vld [vmem:[#allocation2 + $0x588] sm:$0xff]
        %v1019 = vld [vmem:[#allocation2 + $0x590] sm:$0xff]
        %v1020 = vld [vmem:[#allocation2 + $0x598] sm:$0xff]
        %v1021 = vld [vmem:[#allocation2 + $0x5a0] sm:$0xff]
        %v1022 = vld [vmem:[#allocation2 + $0x5a8] sm:$0xff]
        %v1023 = vld [vmem:[#allocation2 + $0x5b0] sm:$0xff]
        %v1024 = vld [vmem:[#allocation2 + $0x5b8] sm:$0xff]
        %v1025 = vld [vmem:[#allocation2 + $0x5c0] sm:$0xff]
        %v1026 = vld [vmem:[#allocation2 + $0x5c8] sm:$0xff]
        %v1027 = vld [vmem:[#allocation2 + $0x5d0] sm:$0xff]
        %v1028 = vld [vmem:[#allocation2 + $0x5d8] sm:$0xff]
        %v1029 = vld [vmem:[#allocation2 + $0x5e0] sm:$0xff]
        %v1030 = vld [vmem:[#allocation2 + $0x5e8] sm:$0xff]
        %v1031 = vld [vmem:[#allocation2 + $0x5f0] sm:$0xff]
        %v1032 = vld [vmem:[#allocation2 + $0x5f8] sm:$0xff]
        %v1033 = vld [vmem:[#allocation2 + $0x600] sm:$0xff]
        %v1034 = vld [vmem:[#allocation2 + $0x608] sm:$0xff]
        %v1035 = vld [vmem:[#allocation2 + $0x610] sm:$0xff]
        %v1036 = vld [vmem:[#allocation2 + $0x618] sm:$0xff]
        %v1037 = vld [vmem:[#allocation2 + $0x620] sm:$0xff]
        %v1038 = vld [vmem:[#allocation2 + $0x628] sm:$0xff]
        %v1039 = vld [vmem:[#allocation2 + $0x630] sm:$0xff]
        %v1040 = vld [vmem:[#allocation2 + $0x638] sm:$0xff]
        %v1041 = vld [vmem:[#allocation2 + $0x640] sm:$0xff]
        %v1042 = vld [vmem:[#allocation2 + $0x648] sm:$0xff]
        %v1043 = vld [vmem:[#allocation2 + $0x650] sm:$0xff]
        %v1044 = vld [vmem:[#allocation2 + $0x658] sm:$0xff]
        %v1045 = vld [vmem:[#allocation2 + $0x660] sm:$0xff]
        %v1046 = vld [vmem:[#allocation2 + $0x668] sm:$0xff]
        %v1047 = vld [vmem:[#allocation2 + $0x670] sm:$0xff]
        %v1048 = vld [vmem:[#allocation2 + $0x678] sm:$0xff]
        %v1049 = vld [vmem:[#allocation2 + $0x680] sm:$0xff]
        %v1050 = vld [vmem:[#allocation2 + $0x688] sm:$0xff]
        %v1051 = vld [vmem:[#allocation2 + $0x690] sm:$0xff]
        %v1052 = vld [vmem:[#allocation2 + $0x698] sm:$0xff]
        %v1053 = vld [vmem:[#allocation2 + $0x6a0] sm:$0xff]
        %v1054 = vld [vmem:[#allocation2 + $0x6a8] sm:$0xff]
        %v1055 = vld [vmem:[#allocation2 + $0x6b0] sm:$0xff]
        %v1056 = vld [vmem:[#allocation2 + $0x6b8] sm:$0xff]
        %v1057 = vld [vmem:[#allocation2 + $0x6c0] sm:$0xff]
        %v1058 = vld [vmem:[#allocation2 + $0x6c8] sm:$0xff]
        %v1059 = vld [vmem:[#allocation2 + $0x6d0] sm:$0xff]
        %v1060 = vld [vmem:[#allocation2 + $0x6d8] sm:$0xff]
        %v1061 = vld [vmem:[#allocation2 + $0x6e0] sm:$0xff]
        %v1062 = vld [vmem:[#allocation2 + $0x6e8] sm:$0xff]
        %v1063 = vld [vmem:[#allocation2 + $0x6f0] sm:$0xff]
        %v1064 = vld [vmem:[#allocation2 + $0x6f8] sm:$0xff]
        %v1065 = vld [vmem:[#allocation2 + $0x700] sm:$0xff]
        %v1066 = vld [vmem:[#allocation2 + $0x708] sm:$0xff]
        %v1067 = vld [vmem:[#allocation2 + $0x710] sm:$0xff]
        %v1068 = vld [vmem:[#allocation2 + $0x718] sm:$0xff]
        %v1069 = vld [vmem:[#allocation2 + $0x720] sm:$0xff]
        %v1070 = vld [vmem:[#allocation2 + $0x728] sm:$0xff]
        %v1071 = vld [vmem:[#allocation2 + $0x730] sm:$0xff]
        %v1072 = vld [vmem:[#allocation2 + $0x738] sm:$0xff]
        %v1073 = vld [vmem:[#allocation2 + $0x740] sm:$0xff]
        %v1074 = vld [vmem:[#allocation2 + $0x748] sm:$0xff]
        %v1075 = vld [vmem:[#allocation2 + $0x750] sm:$0xff]
        %v1076 = vld [vmem:[#allocation2 + $0x758] sm:$0xff]
        %v1077 = vld [vmem:[#allocation2 + $0x760] sm:$0xff]
        %v1078 = vld [vmem:[#allocation2 + $0x768] sm:$0xff]
        %v1079 = vld [vmem:[#allocation2 + $0x770] sm:$0xff]
        %v1080 = vld [vmem:[#allocation2 + $0x778] sm:$0xff]
        %v1081 = vld [vmem:[#allocation2 + $0x780] sm:$0xff]
        %v1082 = vld [vmem:[#allocation2 + $0x788] sm:$0xff]
        %v1083 = vld [vmem:[#allocation2 + $0x790] sm:$0xff]
        %v1084 = vld [vmem:[#allocation2 + $0x798] sm:$0xff]
        %v1085 = vld [vmem:[#allocation2 + $0x7a0] sm:$0xff]
        %v1086 = vld [vmem:[#allocation2 + $0x7a8] sm:$0xff]
        %v1087 = vld [vmem:[#allocation2 + $0x7b0] sm:$0xff]
        %v1088 = vld [vmem:[#allocation2 + $0x7b8] sm:$0xff]
        %v1089 = vld [vmem:[#allocation2 + $0x7c0] sm:$0xff]
        %v1090 = vld [vmem:[#allocation2 + $0x7c8] sm:$0xff]
        %vm1091 = vcmask 850944
        %v1093 = vsel %vm1091, %v656, 0
        %v1096 = vsel %vm1091, %v664, 0
        %v1099 = vsel %vm1091, %v672, 0
        %v1102 = vsel %vm1091, %v680, 0
        %v1105 = vsel %vm1091, %v688, 0
        %v1108 = vsel %vm1091, %v696, 0
        %v1111 = vsel %vm1091, %v704, 0
        %v1114 = vsel %vm1091, %v712, 0
        %v1117 = vsel %vm1091, %v720, 0
        %v1120 = vsel %vm1091, %v728, 0
        %v1123 = vsel %vm1091, %v736, 0
        %v1126 = vsel %vm1091, %v744, 0
        %v1129 = vsel %vm1091, %v752, 0
        %v1132 = vsel %vm1091, %v760, 0
        %v1135 = vsel %vm1091, %v768, 0
        %v1138 = vsel %vm1091, %v776, 0
        %v1141 = vsel %vm1091, %v784, 0
        %v1144 = vsel %vm1091, %v792, 0
        %v1147 = vsel %vm1091, %v800, 0
        %v1150 = vsel %vm1091, %v808, 0
        %v1153 = vsel %vm1091, %v816, 0
        %v1156 = vsel %vm1091, %v824, 0
        %v1159 = vsel %vm1091, %v832, 0
        %v1162 = vsel %vm1091, %v840, 0
        %1164 = vmatprep.subr.mxu0 %v872
        %1165 = vmatpush1.msra.mxu0 %v871
        %1166 = vmatprep.subr.mxu0 %v870
        %1167 = vmatpush1.msra.mxu0 %v869
        %1168 = vmatprep.subr.mxu0 %v868
        %1169 = vmatpush1.msra.mxu0 %v867
        %1170 = vmatprep.subr.mxu0 %v866
        %1171 = vmatpush1.msra.mxu0 %v865
        %1172 = vmatprep.subr.mxu0 %v864
        %1173 = vmatpush1.msra.mxu0 %v863
        %1174 = vmatprep.subr.mxu0 %v862
        %1175 = vmatpush1.msra.mxu0 %v861
        %1176 = vmatprep.subr.mxu0 %v860
        %1177 = vmatpush1.msra.mxu0 %v859
        %1178 = vmatprep.subr.mxu0 %v858
        %1179 = vmatpush1.msra.mxu0 %v857
        %1180 = vmatprep.subr.mxu0 %v856
        %1181 = vmatpush1.msra.mxu0 %v855
        %1182 = vmatprep.subr.mxu0 %v854
        %1183 = vmatpush1.msra.mxu0 %v853
        %1184 = vmatprep.subr.mxu0 %v852
        %1185 = vmatpush1.msra.mxu0 %v851
        %1186 = vmatprep.subr.mxu0 %v850
        %1187 = vmatpush1.msra.mxu0 %v849
        %1188 = vmatprep.subr.mxu0 %v848
        %1189 = vmatpush1.msra.mxu0 %v847
        %1190 = vmatprep.subr.mxu0 %v846
        %1191 = vmatpush1.msra.mxu0 %v845
        %1192 = vmatprep.subr.mxu0 %v844
        %1193 = vmatpush1.msra.mxu0 %v843
        %1194 = vmatprep.subr.mxu0 %v842
        %1195 = vmatpush1.msra.mxu0 %v841
        %1196 = vmatprep.subr.mxu0 %v904
        %1197 = vmatpush2.msra.mxu0 %v903
        %1198 = vmatprep.subr.mxu0 %v902
        %1199 = vmatpush2.msra.mxu0 %v901
        %1200 = vmatprep.subr.mxu0 %v900
        %1201 = vmatpush2.msra.mxu0 %v899
        %1202 = vmatprep.subr.mxu0 %v898
        %1203 = vmatpush2.msra.mxu0 %v897
        %1204 = vmatprep.subr.mxu0 %v896
        %1205 = vmatpush2.msra.mxu0 %v895
        %1206 = vmatprep.subr.mxu0 %v894
        %1207 = vmatpush2.msra.mxu0 %v893
        %1208 = vmatprep.subr.mxu0 %v892
        %1209 = vmatpush2.msra.mxu0 %v891
        %1210 = vmatprep.subr.mxu0 %v890
        %1211 = vmatpush2.msra.mxu0 %v889
        %1212 = vmatprep.subr.mxu0 %v888
        %1213 = vmatpush2.msra.mxu0 %v887
        %1214 = vmatprep.subr.mxu0 %v886
        %1215 = vmatpush2.msra.mxu0 %v885
        %1216 = vmatprep.subr.mxu0 %v884
        %1217 = vmatpush2.msra.mxu0 %v883
        %1218 = vmatprep.subr.mxu0 %v882
        %1219 = vmatpush2.msra.mxu0 %v881
        %1220 = vmatprep.subr.mxu0 %v880
        %1221 = vmatpush2.msra.mxu0 %v879
        %1222 = vmatprep.subr.mxu0 %v878
        %1223 = vmatpush2.msra.mxu0 %v877
        %1224 = vmatprep.subr.mxu0 %v876
        %1225 = vmatpush2.msra.mxu0 %v875
        %1226 = vmatprep.subr.mxu0 %v874
        %1227 = vmatpush2.msra.mxu0 %v873
        %1228 = vmatprep.mubr.f32.mxu0 %v650
        %1229 = vmatmul.mubr.f32.gmra.mxu0 %v649
        %v1230 = vpop.f32.mrf.mxu0
        %v1231 = vadd.f32 0.0, %v1230
        %v1232 = vpop.f32.mrf.mxu0
        %v1233 = vadd.f32 0.0, %v1232
        %1234 = vmatprep.mubr.f32.mxu0 %v658
        %1235 = vmatmul.mubr.f32.gmra.mxu0 %v657
        %v1236 = vpop.f32.mrf.mxu0
        %v1237 = vadd.f32 0.0, %v1236
        %v1238 = vpop.f32.mrf.mxu0
        %v1239 = vadd.f32 0.0, %v1238
        %1240 = vmatprep.mubr.f32.mxu0 %v666
        %1241 = vmatmul.mubr.f32.gmra.mxu0 %v665
        %v1242 = vpop.f32.mrf.mxu0
        %v1243 = vadd.f32 0.0, %v1242
        %v1244 = vpop.f32.mrf.mxu0
        %v1245 = vadd.f32 0.0, %v1244
        %1246 = vmatprep.mubr.f32.mxu0 %v674
        %1247 = vmatmul.mubr.f32.gmra.mxu0 %v673
        %v1248 = vpop.f32.mrf.mxu0
        %v1249 = vadd.f32 0.0, %v1248
        %v1250 = vpop.f32.mrf.mxu0
        %v1251 = vadd.f32 0.0, %v1250
        %1252 = vmatprep.mubr.f32.mxu0 %v682
        %1253 = vmatmul.mubr.f32.gmra.mxu0 %v681
        %v1254 = vpop.f32.mrf.mxu0
        %v1255 = vadd.f32 0.0, %v1254
        %v1256 = vpop.f32.mrf.mxu0
        %v1257 = vadd.f32 0.0, %v1256
        %1258 = vmatprep.mubr.f32.mxu0 %v690
        %1259 = vmatmul.mubr.f32.gmra.mxu0 %v689
        %v1260 = vpop.f32.mrf.mxu0
        %v1261 = vadd.f32 0.0, %v1260
        %v1262 = vpop.f32.mrf.mxu0
        %v1263 = vadd.f32 0.0, %v1262
        %1264 = vmatprep.mubr.f32.mxu0 %v698
        %1265 = vmatmul.mubr.f32.gmra.mxu0 %v697
        %v1266 = vpop.f32.mrf.mxu0
        %v1267 = vadd.f32 0.0, %v1266
        %v1268 = vpop.f32.mrf.mxu0
        %v1269 = vadd.f32 0.0, %v1268
        %1270 = vmatprep.mubr.f32.mxu0 %v706
        %1271 = vmatmul.mubr.f32.gmra.mxu0 %v705
        %v1272 = vpop.f32.mrf.mxu0
        %v1273 = vadd.f32 0.0, %v1272
        %v1274 = vpop.f32.mrf.mxu0
        %v1275 = vadd.f32 0.0, %v1274
        %1276 = vmatprep.mubr.f32.mxu0 %v714
        %1277 = vmatmul.mubr.f32.gmra.mxu0 %v713
        %v1278 = vpop.f32.mrf.mxu0
        %v1279 = vadd.f32 0.0, %v1278
        %v1280 = vpop.f32.mrf.mxu0
        %v1281 = vadd.f32 0.0, %v1280
        %1282 = vmatprep.mubr.f32.mxu0 %v722
        %1283 = vmatmul.mubr.f32.gmra.mxu0 %v721
        %v1284 = vpop.f32.mrf.mxu0
        %v1285 = vadd.f32 0.0, %v1284
        %v1286 = vpop.f32.mrf.mxu0
        %v1287 = vadd.f32 0.0, %v1286
        %1288 = vmatprep.mubr.f32.mxu0 %v730
        %1289 = vmatmul.mubr.f32.gmra.mxu0 %v729
        %v1290 = vpop.f32.mrf.mxu0
        %v1291 = vadd.f32 0.0, %v1290
        %v1292 = vpop.f32.mrf.mxu0
        %v1293 = vadd.f32 0.0, %v1292
        %1294 = vmatprep.mubr.f32.mxu0 %v738
        %1295 = vmatmul.mubr.f32.gmra.mxu0 %v737
        %v1296 = vpop.f32.mrf.mxu0
        %v1297 = vadd.f32 0.0, %v1296
        %v1298 = vpop.f32.mrf.mxu0
        %v1299 = vadd.f32 0.0, %v1298
        %1300 = vmatprep.mubr.f32.mxu0 %v746
        %1301 = vmatmul.mubr.f32.gmra.mxu0 %v745
        %v1302 = vpop.f32.mrf.mxu0
        %v1303 = vadd.f32 0.0, %v1302
        %v1304 = vpop.f32.mrf.mxu0
        %v1305 = vadd.f32 0.0, %v1304
        %1306 = vmatprep.mubr.f32.mxu0 %v754
        %1307 = vmatmul.mubr.f32.gmra.mxu0 %v753
        %v1308 = vpop.f32.mrf.mxu0
        %v1309 = vadd.f32 0.0, %v1308
        %v1310 = vpop.f32.mrf.mxu0
        %v1311 = vadd.f32 0.0, %v1310
        %1312 = vmatprep.mubr.f32.mxu0 %v762
        %1313 = vmatmul.mubr.f32.gmra.mxu0 %v761
        %v1314 = vpop.f32.mrf.mxu0
        %v1315 = vadd.f32 0.0, %v1314
        %v1316 = vpop.f32.mrf.mxu0
        %v1317 = vadd.f32 0.0, %v1316
        %1318 = vmatprep.mubr.f32.mxu0 %v770
        %1319 = vmatmul.mubr.f32.gmra.mxu0 %v769
        %v1320 = vpop.f32.mrf.mxu0
        %v1321 = vadd.f32 0.0, %v1320
        %v1322 = vpop.f32.mrf.mxu0
        %v1323 = vadd.f32 0.0, %v1322
        %1324 = vmatprep.mubr.f32.mxu0 %v778
        %1325 = vmatmul.mubr.f32.gmra.mxu0 %v777
        %v1326 = vpop.f32.mrf.mxu0
        %v1327 = vadd.f32 0.0, %v1326
        %v1328 = vpop.f32.mrf.mxu0
        %v1329 = vadd.f32 0.0, %v1328
        %1330 = vmatprep.mubr.f32.mxu0 %v786
        %1331 = vmatmul.mubr.f32.gmra.mxu0 %v785
        %v1332 = vpop.f32.mrf.mxu0
        %v1333 = vadd.f32 0.0, %v1332
        %v1334 = vpop.f32.mrf.mxu0
        %v1335 = vadd.f32 0.0, %v1334
        %1336 = vmatprep.mubr.f32.mxu0 %v794
        %1337 = vmatmul.mubr.f32.gmra.mxu0 %v793
        %v1338 = vpop.f32.mrf.mxu0
        %v1339 = vadd.f32 0.0, %v1338
        %v1340 = vpop.f32.mrf.mxu0
        %v1341 = vadd.f32 0.0, %v1340
        %1342 = vmatprep.mubr.f32.mxu0 %v802
        %1343 = vmatmul.mubr.f32.gmra.mxu0 %v801
        %v1344 = vpop.f32.mrf.mxu0
        %v1345 = vadd.f32 0.0, %v1344
        %v1346 = vpop.f32.mrf.mxu0
        %v1347 = vadd.f32 0.0, %v1346
        %1348 = vmatprep.mubr.f32.mxu0 %v810
        %1349 = vmatmul.mubr.f32.gmra.mxu0 %v809
        %v1350 = vpop.f32.mrf.mxu0
        %v1351 = vadd.f32 0.0, %v1350
        %v1352 = vpop.f32.mrf.mxu0
        %v1353 = vadd.f32 0.0, %v1352
        %1354 = vmatprep.mubr.f32.mxu0 %v818
        %1355 = vmatmul.mubr.f32.gmra.mxu0 %v817
        %v1356 = vpop.f32.mrf.mxu0
        %v1357 = vadd.f32 0.0, %v1356
        %v1358 = vpop.f32.mrf.mxu0
        %v1359 = vadd.f32 0.0, %v1358
        %1360 = vmatprep.mubr.f32.mxu0 %v826
        %1361 = vmatmul.mubr.f32.gmra.mxu0 %v825
        %v1362 = vpop.f32.mrf.mxu0
        %v1363 = vadd.f32 0.0, %v1362
        %v1364 = vpop.f32.mrf.mxu0
        %v1365 = vadd.f32 0.0, %v1364
        %1366 = vmatprep.mubr.f32.mxu0 %v834
        %1367 = vmatmul.mubr.f32.gmra.mxu0 %v833
        %v1368 = vpop.f32.mrf.mxu0
        %v1369 = vadd.f32 0.0, %v1368
        %v1370 = vpop.f32.mrf.mxu0
        %v1371 = vadd.f32 0.0, %v1370
        %1372 = vdwg.mxu0
        %1373 = vmatprep.subr.mxu0 %v936
        %1374 = vmatpush1.msra.mxu0 %v935
        %1375 = vmatprep.subr.mxu0 %v934
        %1376 = vmatpush1.msra.mxu0 %v933
        %1377 = vmatprep.subr.mxu0 %v932
        %1378 = vmatpush1.msra.mxu0 %v931
        %1379 = vmatprep.subr.mxu0 %v930
        %1380 = vmatpush1.msra.mxu0 %v929
        %1381 = vmatprep.subr.mxu0 %v928
        %1382 = vmatpush1.msra.mxu0 %v927
        %1383 = vmatprep.subr.mxu0 %v926
        %1384 = vmatpush1.msra.mxu0 %v925
        %1385 = vmatprep.subr.mxu0 %v924
        %1386 = vmatpush1.msra.mxu0 %v923
        %1387 = vmatprep.subr.mxu0 %v922
        %1388 = vmatpush1.msra.mxu0 %v921
        %1389 = vmatprep.subr.mxu0 %v920
        %1390 = vmatpush1.msra.mxu0 %v919
        %1391 = vmatprep.subr.mxu0 %v918
        %1392 = vmatpush1.msra.mxu0 %v917
        %1393 = vmatprep.subr.mxu0 %v916
        %1394 = vmatpush1.msra.mxu0 %v915
        %1395 = vmatprep.subr.mxu0 %v914
        %1396 = vmatpush1.msra.mxu0 %v913
        %1397 = vmatprep.subr.mxu0 %v912
        %1398 = vmatpush1.msra.mxu0 %v911
        %1399 = vmatprep.subr.mxu0 %v910
        %1400 = vmatpush1.msra.mxu0 %v909
        %1401 = vmatprep.subr.mxu0 %v908
        %1402 = vmatpush1.msra.mxu0 %v907
        %1403 = vmatprep.subr.mxu0 %v906
        %1404 = vmatpush1.msra.mxu0 %v905
        %1405 = vmatprep.subr.mxu0 %v968
        %1406 = vmatpush2.msra.mxu0 %v967
        %1407 = vmatprep.subr.mxu0 %v966
        %1408 = vmatpush2.msra.mxu0 %v965
        %1409 = vmatprep.subr.mxu0 %v964
        %1410 = vmatpush2.msra.mxu0 %v963
        %1411 = vmatprep.subr.mxu0 %v962
        %1412 = vmatpush2.msra.mxu0 %v961
        %1413 = vmatprep.subr.mxu0 %v960
        %1414 = vmatpush2.msra.mxu0 %v959
        %1415 = vmatprep.subr.mxu0 %v958
        %1416 = vmatpush2.msra.mxu0 %v957
        %1417 = vmatprep.subr.mxu0 %v956
        %1418 = vmatpush2.msra.mxu0 %v955
        %1419 = vmatprep.subr.mxu0 %v954
        %1420 = vmatpush2.msra.mxu0 %v953
        %1421 = vmatprep.subr.mxu0 %v952
        %1422 = vmatpush2.msra.mxu0 %v951
        %1423 = vmatprep.subr.mxu0 %v950
        %1424 = vmatpush2.msra.mxu0 %v949
        %1425 = vmatprep.subr.mxu0 %v948
        %1426 = vmatpush2.msra.mxu0 %v947
        %1427 = vmatprep.subr.mxu0 %v946
        %1428 = vmatpush2.msra.mxu0 %v945
        %1429 = vmatprep.subr.mxu0 %v944
        %1430 = vmatpush2.msra.mxu0 %v943
        %1431 = vmatprep.subr.mxu0 %v942
        %1432 = vmatpush2.msra.mxu0 %v941
        %1433 = vmatprep.subr.mxu0 %v940
        %1434 = vmatpush2.msra.mxu0 %v939
        %1435 = vmatprep.subr.mxu0 %v938
        %1436 = vmatpush2.msra.mxu0 %v937
        %1437 = vmatprep.mubr.f32.mxu0 %v652
        %1438 = vmatmul.mubr.f32.gmra.mxu0 %v651
        %v1439 = vpop.f32.mrf.mxu0
        %v1440 = vadd.f32 %v1231, %v1439
        %v1441 = vpop.f32.mrf.mxu0
        %v1442 = vadd.f32 %v1233, %v1441
        %1443 = vmatprep.mubr.f32.mxu0 %v660
        %1444 = vmatmul.mubr.f32.gmra.mxu0 %v659
        %v1445 = vpop.f32.mrf.mxu0
        %v1446 = vadd.f32 %v1237, %v1445
        %v1447 = vpop.f32.mrf.mxu0
        %v1448 = vadd.f32 %v1239, %v1447
        %1449 = vmatprep.mubr.f32.mxu0 %v668
        %1450 = vmatmul.mubr.f32.gmra.mxu0 %v667
        %v1451 = vpop.f32.mrf.mxu0
        %v1452 = vadd.f32 %v1243, %v1451
        %v1453 = vpop.f32.mrf.mxu0
        %v1454 = vadd.f32 %v1245, %v1453
        %1455 = vmatprep.mubr.f32.mxu0 %v676
        %1456 = vmatmul.mubr.f32.gmra.mxu0 %v675
        %v1457 = vpop.f32.mrf.mxu0
        %v1458 = vadd.f32 %v1249, %v1457
        %v1459 = vpop.f32.mrf.mxu0
        %v1460 = vadd.f32 %v1251, %v1459
        %1461 = vmatprep.mubr.f32.mxu0 %v684
        %1462 = vmatmul.mubr.f32.gmra.mxu0 %v683
        %v1463 = vpop.f32.mrf.mxu0
        %v1464 = vadd.f32 %v1255, %v1463
        %v1465 = vpop.f32.mrf.mxu0
        %v1466 = vadd.f32 %v1257, %v1465
        %1467 = vmatprep.mubr.f32.mxu0 %v692
        %1468 = vmatmul.mubr.f32.gmra.mxu0 %v691
        %v1469 = vpop.f32.mrf.mxu0
        %v1470 = vadd.f32 %v1261, %v1469
        %v1471 = vpop.f32.mrf.mxu0
        %v1472 = vadd.f32 %v1263, %v1471
        %1473 = vmatprep.mubr.f32.mxu0 %v700
        %1474 = vmatmul.mubr.f32.gmra.mxu0 %v699
        %v1475 = vpop.f32.mrf.mxu0
        %v1476 = vadd.f32 %v1267, %v1475
        %v1477 = vpop.f32.mrf.mxu0
        %v1478 = vadd.f32 %v1269, %v1477
        %1479 = vmatprep.mubr.f32.mxu0 %v708
        %1480 = vmatmul.mubr.f32.gmra.mxu0 %v707
        %v1481 = vpop.f32.mrf.mxu0
        %v1482 = vadd.f32 %v1273, %v1481
        %v1483 = vpop.f32.mrf.mxu0
        %v1484 = vadd.f32 %v1275, %v1483
        %1485 = vmatprep.mubr.f32.mxu0 %v716
        %1486 = vmatmul.mubr.f32.gmra.mxu0 %v715
        %v1487 = vpop.f32.mrf.mxu0
        %v1488 = vadd.f32 %v1279, %v1487
        %v1489 = vpop.f32.mrf.mxu0
        %v1490 = vadd.f32 %v1281, %v1489
        %1491 = vmatprep.mubr.f32.mxu0 %v724
        %1492 = vmatmul.mubr.f32.gmra.mxu0 %v723
        %v1493 = vpop.f32.mrf.mxu0
        %v1494 = vadd.f32 %v1285, %v1493
        %v1495 = vpop.f32.mrf.mxu0
        %v1496 = vadd.f32 %v1287, %v1495
        %1497 = vmatprep.mubr.f32.mxu0 %v732
        %1498 = vmatmul.mubr.f32.gmra.mxu0 %v731
        %v1499 = vpop.f32.mrf.mxu0
        %v1500 = vadd.f32 %v1291, %v1499
        %v1501 = vpop.f32.mrf.mxu0
        %v1502 = vadd.f32 %v1293, %v1501
        %1503 = vmatprep.mubr.f32.mxu0 %v740
        %1504 = vmatmul.mubr.f32.gmra.mxu0 %v739
        %v1505 = vpop.f32.mrf.mxu0
        %v1506 = vadd.f32 %v1297, %v1505
        %v1507 = vpop.f32.mrf.mxu0
        %v1508 = vadd.f32 %v1299, %v1507
        %1509 = vmatprep.mubr.f32.mxu0 %v748
        %1510 = vmatmul.mubr.f32.gmra.mxu0 %v747
        %v1511 = vpop.f32.mrf.mxu0
        %v1512 = vadd.f32 %v1303, %v1511
        %v1513 = vpop.f32.mrf.mxu0
        %v1514 = vadd.f32 %v1305, %v1513
        %1515 = vmatprep.mubr.f32.mxu0 %v756
        %1516 = vmatmul.mubr.f32.gmra.mxu0 %v755
        %v1517 = vpop.f32.mrf.mxu0
        %v1518 = vadd.f32 %v1309, %v1517
        %v1519 = vpop.f32.mrf.mxu0
        %v1520 = vadd.f32 %v1311, %v1519
        %1521 = vmatprep.mubr.f32.mxu0 %v764
        %1522 = vmatmul.mubr.f32.gmra.mxu0 %v763
        %v1523 = vpop.f32.mrf.mxu0
        %v1524 = vadd.f32 %v1315, %v1523
        %v1525 = vpop.f32.mrf.mxu0
        %v1526 = vadd.f32 %v1317, %v1525
        %1527 = vmatprep.mubr.f32.mxu0 %v772
        %1528 = vmatmul.mubr.f32.gmra.mxu0 %v771
        %v1529 = vpop.f32.mrf.mxu0
        %v1530 = vadd.f32 %v1321, %v1529
        %v1531 = vpop.f32.mrf.mxu0
        %v1532 = vadd.f32 %v1323, %v1531
        %1533 = vmatprep.mubr.f32.mxu0 %v780
        %1534 = vmatmul.mubr.f32.gmra.mxu0 %v779
        %v1535 = vpop.f32.mrf.mxu0
        %v1536 = vadd.f32 %v1327, %v1535
        %v1537 = vpop.f32.mrf.mxu0
        %v1538 = vadd.f32 %v1329, %v1537
        %1539 = vmatprep.mubr.f32.mxu0 %v788
        %1540 = vmatmul.mubr.f32.gmra.mxu0 %v787
        %v1541 = vpop.f32.mrf.mxu0
        %v1542 = vadd.f32 %v1333, %v1541
        %v1543 = vpop.f32.mrf.mxu0
        %v1544 = vadd.f32 %v1335, %v1543
        %1545 = vmatprep.mubr.f32.mxu0 %v796
        %1546 = vmatmul.mubr.f32.gmra.mxu0 %v795
        %v1547 = vpop.f32.mrf.mxu0
        %v1548 = vadd.f32 %v1339, %v1547
        %v1549 = vpop.f32.mrf.mxu0
        %v1550 = vadd.f32 %v1341, %v1549
        %1551 = vmatprep.mubr.f32.mxu0 %v804
        %1552 = vmatmul.mubr.f32.gmra.mxu0 %v803
        %v1553 = vpop.f32.mrf.mxu0
        %v1554 = vadd.f32 %v1345, %v1553
        %v1555 = vpop.f32.mrf.mxu0
        %v1556 = vadd.f32 %v1347, %v1555
        %1557 = vmatprep.mubr.f32.mxu0 %v812
        %1558 = vmatmul.mubr.f32.gmra.mxu0 %v811
        %v1559 = vpop.f32.mrf.mxu0
        %v1560 = vadd.f32 %v1351, %v1559
        %v1561 = vpop.f32.mrf.mxu0
        %v1562 = vadd.f32 %v1353, %v1561
        %1563 = vmatprep.mubr.f32.mxu0 %v820
        %1564 = vmatmul.mubr.f32.gmra.mxu0 %v819
        %v1565 = vpop.f32.mrf.mxu0
        %v1566 = vadd.f32 %v1357, %v1565
        %v1567 = vpop.f32.mrf.mxu0
        %v1568 = vadd.f32 %v1359, %v1567
        %1569 = vmatprep.mubr.f32.mxu0 %v828
        %1570 = vmatmul.mubr.f32.gmra.mxu0 %v827
        %v1571 = vpop.f32.mrf.mxu0
        %v1572 = vadd.f32 %v1363, %v1571
        %v1573 = vpop.f32.mrf.mxu0
        %v1574 = vadd.f32 %v1365, %v1573
        %1575 = vmatprep.mubr.f32.mxu0 %v836
        %1576 = vmatmul.mubr.f32.gmra.mxu0 %v835
        %v1577 = vpop.f32.mrf.mxu0
        %v1578 = vadd.f32 %v1369, %v1577
        %v1579 = vpop.f32.mrf.mxu0
        %v1580 = vadd.f32 %v1371, %v1579
        %1581 = vdwg.mxu0
        %1582 = vmatprep.subr.mxu0 %v1000
        %1583 = vmatpush1.msra.mxu0 %v999
        %1584 = vmatprep.subr.mxu0 %v998
        %1585 = vmatpush1.msra.mxu0 %v997
        %1586 = vmatprep.subr.mxu0 %v996
        %1587 = vmatpush1.msra.mxu0 %v995
        %1588 = vmatprep.subr.mxu0 %v994
        %1589 = vmatpush1.msra.mxu0 %v993
        %1590 = vmatprep.subr.mxu0 %v992
        %1591 = vmatpush1.msra.mxu0 %v991
        %1592 = vmatprep.subr.mxu0 %v990
        %1593 = vmatpush1.msra.mxu0 %v989
        %1594 = vmatprep.subr.mxu0 %v988
        %1595 = vmatpush1.msra.mxu0 %v987
        %1596 = vmatprep.subr.mxu0 %v986
        %1597 = vmatpush1.msra.mxu0 %v985
        %1598 = vmatprep.subr.mxu0 %v984
        %1599 = vmatpush1.msra.mxu0 %v983
        %1600 = vmatprep.subr.mxu0 %v982
        %1601 = vmatpush1.msra.mxu0 %v981
        %1602 = vmatprep.subr.mxu0 %v980
        %1603 = vmatpush1.msra.mxu0 %v979
        %1604 = vmatprep.subr.mxu0 %v978
        %1605 = vmatpush1.msra.mxu0 %v977
        %1606 = vmatprep.subr.mxu0 %v976
        %1607 = vmatpush1.msra.mxu0 %v975
        %1608 = vmatprep.subr.mxu0 %v974
        %1609 = vmatpush1.msra.mxu0 %v973
        %1610 = vmatprep.subr.mxu0 %v972
        %1611 = vmatpush1.msra.mxu0 %v971
        %1612 = vmatprep.subr.mxu0 %v970
        %1613 = vmatpush1.msra.mxu0 %v969
        %1614 = vmatprep.subr.mxu0 %v1032
        %1615 = vmatpush2.msra.mxu0 %v1031
        %1616 = vmatprep.subr.mxu0 %v1030
        %1617 = vmatpush2.msra.mxu0 %v1029
        %1618 = vmatprep.subr.mxu0 %v1028
        %1619 = vmatpush2.msra.mxu0 %v1027
        %1620 = vmatprep.subr.mxu0 %v1026
        %1621 = vmatpush2.msra.mxu0 %v1025
        %1622 = vmatprep.subr.mxu0 %v1024
        %1623 = vmatpush2.msra.mxu0 %v1023
        %1624 = vmatprep.subr.mxu0 %v1022
        %1625 = vmatpush2.msra.mxu0 %v1021
        %1626 = vmatprep.subr.mxu0 %v1020
        %1627 = vmatpush2.msra.mxu0 %v1019
        %1628 = vmatprep.subr.mxu0 %v1018
        %1629 = vmatpush2.msra.mxu0 %v1017
        %1630 = vmatprep.subr.mxu0 %v1016
        %1631 = vmatpush2.msra.mxu0 %v1015
        %1632 = vmatprep.subr.mxu0 %v1014
        %1633 = vmatpush2.msra.mxu0 %v1013
        %1634 = vmatprep.subr.mxu0 %v1012
        %1635 = vmatpush2.msra.mxu0 %v1011
        %1636 = vmatprep.subr.mxu0 %v1010
        %1637 = vmatpush2.msra.mxu0 %v1009
        %1638 = vmatprep.subr.mxu0 %v1008
        %1639 = vmatpush2.msra.mxu0 %v1007
        %1640 = vmatprep.subr.mxu0 %v1006
        %1641 = vmatpush2.msra.mxu0 %v1005
        %1642 = vmatprep.subr.mxu0 %v1004
        %1643 = vmatpush2.msra.mxu0 %v1003
        %1644 = vmatprep.subr.mxu0 %v1002
        %1645 = vmatpush2.msra.mxu0 %v1001
        %1646 = vmatprep.mubr.f32.mxu0 %v654
        %1647 = vmatmul.mubr.f32.gmra.mxu0 %v653
        %v1648 = vpop.f32.mrf.mxu0
        %v1649 = vadd.f32 %v1440, %v1648
        %v1650 = vpop.f32.mrf.mxu0
        %v1651 = vadd.f32 %v1442, %v1650
        %1652 = vmatprep.mubr.f32.mxu0 %v662
        %1653 = vmatmul.mubr.f32.gmra.mxu0 %v661
        %v1654 = vpop.f32.mrf.mxu0
        %v1655 = vadd.f32 %v1446, %v1654
        %v1656 = vpop.f32.mrf.mxu0
        %v1657 = vadd.f32 %v1448, %v1656
        %1658 = vmatprep.mubr.f32.mxu0 %v670
        %1659 = vmatmul.mubr.f32.gmra.mxu0 %v669
        %v1660 = vpop.f32.mrf.mxu0
        %v1661 = vadd.f32 %v1452, %v1660
        %v1662 = vpop.f32.mrf.mxu0
        %v1663 = vadd.f32 %v1454, %v1662
        %1664 = vmatprep.mubr.f32.mxu0 %v678
        %1665 = vmatmul.mubr.f32.gmra.mxu0 %v677
        %v1666 = vpop.f32.mrf.mxu0
        %v1667 = vadd.f32 %v1458, %v1666
        %v1668 = vpop.f32.mrf.mxu0
        %v1669 = vadd.f32 %v1460, %v1668
        %1670 = vmatprep.mubr.f32.mxu0 %v686
        %1671 = vmatmul.mubr.f32.gmra.mxu0 %v685
        %v1672 = vpop.f32.mrf.mxu0
        %v1673 = vadd.f32 %v1464, %v1672
        %v1674 = vpop.f32.mrf.mxu0
        %v1675 = vadd.f32 %v1466, %v1674
        %1676 = vmatprep.mubr.f32.mxu0 %v694
        %1677 = vmatmul.mubr.f32.gmra.mxu0 %v693
        %v1678 = vpop.f32.mrf.mxu0
        %v1679 = vadd.f32 %v1470, %v1678
        %v1680 = vpop.f32.mrf.mxu0
        %v1681 = vadd.f32 %v1472, %v1680
        %1682 = vmatprep.mubr.f32.mxu0 %v702
        %1683 = vmatmul.mubr.f32.gmra.mxu0 %v701
        %v1684 = vpop.f32.mrf.mxu0
        %v1685 = vadd.f32 %v1476, %v1684
        %v1686 = vpop.f32.mrf.mxu0
        %v1687 = vadd.f32 %v1478, %v1686
        %1688 = vmatprep.mubr.f32.mxu0 %v710
        %1689 = vmatmul.mubr.f32.gmra.mxu0 %v709
        %v1690 = vpop.f32.mrf.mxu0
        %v1691 = vadd.f32 %v1482, %v1690
        %v1692 = vpop.f32.mrf.mxu0
        %v1693 = vadd.f32 %v1484, %v1692
        %1694 = vmatprep.mubr.f32.mxu0 %v718
        %1695 = vmatmul.mubr.f32.gmra.mxu0 %v717
        %v1696 = vpop.f32.mrf.mxu0
        %v1697 = vadd.f32 %v1488, %v1696
        %v1698 = vpop.f32.mrf.mxu0
        %v1699 = vadd.f32 %v1490, %v1698
        %1700 = vmatprep.mubr.f32.mxu0 %v726
        %1701 = vmatmul.mubr.f32.gmra.mxu0 %v725
        %v1702 = vpop.f32.mrf.mxu0
        %v1703 = vadd.f32 %v1494, %v1702
        %v1704 = vpop.f32.mrf.mxu0
        %v1705 = vadd.f32 %v1496, %v1704
        %1706 = vmatprep.mubr.f32.mxu0 %v734
        %1707 = vmatmul.mubr.f32.gmra.mxu0 %v733
        %v1708 = vpop.f32.mrf.mxu0
        %v1709 = vadd.f32 %v1500, %v1708
        %v1710 = vpop.f32.mrf.mxu0
        %v1711 = vadd.f32 %v1502, %v1710
        %1712 = vmatprep.mubr.f32.mxu0 %v742
        %1713 = vmatmul.mubr.f32.gmra.mxu0 %v741
        %v1714 = vpop.f32.mrf.mxu0
        %v1715 = vadd.f32 %v1506, %v1714
        %v1716 = vpop.f32.mrf.mxu0
        %v1717 = vadd.f32 %v1508, %v1716
        %1718 = vmatprep.mubr.f32.mxu0 %v750
        %1719 = vmatmul.mubr.f32.gmra.mxu0 %v749
        %v1720 = vpop.f32.mrf.mxu0
        %v1721 = vadd.f32 %v1512, %v1720
        %v1722 = vpop.f32.mrf.mxu0
        %v1723 = vadd.f32 %v1514, %v1722
        %1724 = vmatprep.mubr.f32.mxu0 %v758
        %1725 = vmatmul.mubr.f32.gmra.mxu0 %v757
        %v1726 = vpop.f32.mrf.mxu0
        %v1727 = vadd.f32 %v1518, %v1726
        %v1728 = vpop.f32.mrf.mxu0
        %v1729 = vadd.f32 %v1520, %v1728
        %1730 = vmatprep.mubr.f32.mxu0 %v766
        %1731 = vmatmul.mubr.f32.gmra.mxu0 %v765
        %v1732 = vpop.f32.mrf.mxu0
        %v1733 = vadd.f32 %v1524, %v1732
        %v1734 = vpop.f32.mrf.mxu0
        %v1735 = vadd.f32 %v1526, %v1734
        %1736 = vmatprep.mubr.f32.mxu0 %v774
        %1737 = vmatmul.mubr.f32.gmra.mxu0 %v773
        %v1738 = vpop.f32.mrf.mxu0
        %v1739 = vadd.f32 %v1530, %v1738
        %v1740 = vpop.f32.mrf.mxu0
        %v1741 = vadd.f32 %v1532, %v1740
        %1742 = vmatprep.mubr.f32.mxu0 %v782
        %1743 = vmatmul.mubr.f32.gmra.mxu0 %v781
        %v1744 = vpop.f32.mrf.mxu0
        %v1745 = vadd.f32 %v1536, %v1744
        %v1746 = vpop.f32.mrf.mxu0
        %v1747 = vadd.f32 %v1538, %v1746
        %1748 = vmatprep.mubr.f32.mxu0 %v790
        %1749 = vmatmul.mubr.f32.gmra.mxu0 %v789
        %v1750 = vpop.f32.mrf.mxu0
        %v1751 = vadd.f32 %v1542, %v1750
        %v1752 = vpop.f32.mrf.mxu0
        %v1753 = vadd.f32 %v1544, %v1752
        %1754 = vmatprep.mubr.f32.mxu0 %v798
        %1755 = vmatmul.mubr.f32.gmra.mxu0 %v797
        %v1756 = vpop.f32.mrf.mxu0
        %v1757 = vadd.f32 %v1548, %v1756
        %v1758 = vpop.f32.mrf.mxu0
        %v1759 = vadd.f32 %v1550, %v1758
        %1760 = vmatprep.mubr.f32.mxu0 %v806
        %1761 = vmatmul.mubr.f32.gmra.mxu0 %v805
        %v1762 = vpop.f32.mrf.mxu0
        %v1763 = vadd.f32 %v1554, %v1762
        %v1764 = vpop.f32.mrf.mxu0
        %v1765 = vadd.f32 %v1556, %v1764
        %1766 = vmatprep.mubr.f32.mxu0 %v814
        %1767 = vmatmul.mubr.f32.gmra.mxu0 %v813
        %v1768 = vpop.f32.mrf.mxu0
        %v1769 = vadd.f32 %v1560, %v1768
        %v1770 = vpop.f32.mrf.mxu0
        %v1771 = vadd.f32 %v1562, %v1770
        %1772 = vmatprep.mubr.f32.mxu0 %v822
        %1773 = vmatmul.mubr.f32.gmra.mxu0 %v821
        %v1774 = vpop.f32.mrf.mxu0
        %v1775 = vadd.f32 %v1566, %v1774
        %v1776 = vpop.f32.mrf.mxu0
        %v1777 = vadd.f32 %v1568, %v1776
        %1778 = vmatprep.mubr.f32.mxu0 %v830
        %1779 = vmatmul.mubr.f32.gmra.mxu0 %v829
        %v1780 = vpop.f32.mrf.mxu0
        %v1781 = vadd.f32 %v1572, %v1780
        %v1782 = vpop.f32.mrf.mxu0
        %v1783 = vadd.f32 %v1574, %v1782
        %1784 = vmatprep.mubr.f32.mxu0 %v838
        %1785 = vmatmul.mubr.f32.gmra.mxu0 %v837
        %v1786 = vpop.f32.mrf.mxu0
        %v1787 = vadd.f32 %v1578, %v1786
        %v1788 = vpop.f32.mrf.mxu0
        %v1789 = vadd.f32 %v1580, %v1788
        %1790 = vdwg.mxu0
        %1791 = vmatprep.subr.mxu0 %v1064
        %1792 = vmatpush1.msra.mxu0 %v1063
        %1793 = vmatprep.subr.mxu0 %v1062
        %1794 = vmatpush1.msra.mxu0 %v1061
        %1795 = vmatprep.subr.mxu0 %v1060
        %1796 = vmatpush1.msra.mxu0 %v1059
        %1797 = vmatprep.subr.mxu0 %v1058
        %1798 = vmatpush1.msra.mxu0 %v1057
        %1799 = vmatprep.subr.mxu0 %v1056
        %1800 = vmatpush1.msra.mxu0 %v1055
        %1801 = vmatprep.subr.mxu0 %v1054
        %1802 = vmatpush1.msra.mxu0 %v1053
        %1803 = vmatprep.subr.mxu0 %v1052
        %1804 = vmatpush1.msra.mxu0 %v1051
        %1805 = vmatprep.subr.mxu0 %v1050
        %1806 = vmatpush1.msra.mxu0 %v1049
        %1807 = vmatprep.subr.mxu0 %v1048
        %1808 = vmatpush1.msra.mxu0 %v1047
        %1809 = vmatprep.subr.mxu0 %v1046
        %1810 = vmatpush1.msra.mxu0 %v1045
        %1811 = vmatprep.subr.mxu0 %v1044
        %1812 = vmatpush1.msra.mxu0 %v1043
        %1813 = vmatprep.subr.mxu0 %v1042
        %1814 = vmatpush1.msra.mxu0 %v1041
        %1815 = vmatprep.subr.mxu0 %v1040
        %1816 = vmatpush1.msra.mxu0 %v1039
        %1817 = vmatprep.subr.mxu0 %v1038
        %1818 = vmatpush1.msra.mxu0 %v1037
        %1819 = vmatprep.subr.mxu0 %v1036
        %1820 = vmatpush1.msra.mxu0 %v1035
        %1821 = vmatprep.subr.mxu0 %v1034
        %1822 = vmatpush1.msra.mxu0 %v1033
        %1823 = vmatprep.subr.mxu0 0.0
        %1824 = vmatpush2.msra.mxu0 0.0
        %1825 = vmatprep.subr.mxu0 0.0
        %1826 = vmatpush2.msra.mxu0 0.0
        %1827 = vmatprep.subr.mxu0 0.0
        %1828 = vmatpush2.msra.mxu0 0.0
        %1829 = vmatprep.subr.mxu0 %v1090
        %1830 = vmatpush2.msra.mxu0 %v1089
        %1831 = vmatprep.subr.mxu0 %v1088
        %1832 = vmatpush2.msra.mxu0 %v1087
        %1833 = vmatprep.subr.mxu0 %v1086
        %1834 = vmatpush2.msra.mxu0 %v1085
        %1835 = vmatprep.subr.mxu0 %v1084
        %1836 = vmatpush2.msra.mxu0 %v1083
        %1837 = vmatprep.subr.mxu0 %v1082
        %1838 = vmatpush2.msra.mxu0 %v1081
        %1839 = vmatprep.subr.mxu0 %v1080
        %1840 = vmatpush2.msra.mxu0 %v1079
        %1841 = vmatprep.subr.mxu0 %v1078
        %1842 = vmatpush2.msra.mxu0 %v1077
        %1843 = vmatprep.subr.mxu0 %v1076
        %1844 = vmatpush2.msra.mxu0 %v1075
        %1845 = vmatprep.subr.mxu0 %v1074
        %1846 = vmatpush2.msra.mxu0 %v1073
        %1847 = vmatprep.subr.mxu0 %v1072
        %1848 = vmatpush2.msra.mxu0 %v1071
        %1849 = vmatprep.subr.mxu0 %v1070
        %1850 = vmatpush2.msra.mxu0 %v1069
        %1851 = vmatprep.subr.mxu0 %v1068
        %1852 = vmatpush2.msra.mxu0 %v1067
        %1853 = vmatprep.subr.mxu0 %v1066
        %1854 = vmatpush2.msra.mxu0 %v1065
        %1855 = vmatprep.mubr.f32.mxu0 %v1093
        %1856 = vmatmul.mubr.f32.gmra.mxu0 %v655
        %v1857 = vpop.f32.mrf.mxu0
        %v1858 = vadd.f32 %v1649, %v1857
        %v1859 = vpop.f32.mrf.mxu0
        %v1860 = vadd.f32 %v1651, %v1859
        %1861 = vmatprep.mubr.f32.mxu0 %v1096
        %1862 = vmatmul.mubr.f32.gmra.mxu0 %v663
        %v1863 = vpop.f32.mrf.mxu0
        %v1864 = vadd.f32 %v1655, %v1863
        %v1865 = vpop.f32.mrf.mxu0
        %v1866 = vadd.f32 %v1657, %v1865
        %1867 = vmatprep.mubr.f32.mxu0 %v1099
        %1868 = vmatmul.mubr.f32.gmra.mxu0 %v671
        %v1869 = vpop.f32.mrf.mxu0
        %v1870 = vadd.f32 %v1661, %v1869
        %v1871 = vpop.f32.mrf.mxu0
        %v1872 = vadd.f32 %v1663, %v1871
        %1873 = vmatprep.mubr.f32.mxu0 %v1102
        %1874 = vmatmul.mubr.f32.gmra.mxu0 %v679
        %v1875 = vpop.f32.mrf.mxu0
        %v1876 = vadd.f32 %v1667, %v1875
        %v1877 = vpop.f32.mrf.mxu0
        %v1878 = vadd.f32 %v1669, %v1877
        %1879 = vmatprep.mubr.f32.mxu0 %v1105
        %1880 = vmatmul.mubr.f32.gmra.mxu0 %v687
        %v1881 = vpop.f32.mrf.mxu0
        %v1882 = vadd.f32 %v1673, %v1881
        %v1883 = vpop.f32.mrf.mxu0
        %v1884 = vadd.f32 %v1675, %v1883
        %1885 = vmatprep.mubr.f32.mxu0 %v1108
        %1886 = vmatmul.mubr.f32.gmra.mxu0 %v695
        %v1887 = vpop.f32.mrf.mxu0
        %v1888 = vadd.f32 %v1679, %v1887
        %v1889 = vpop.f32.mrf.mxu0
        %v1890 = vadd.f32 %v1681, %v1889
        %1891 = vmatprep.mubr.f32.mxu0 %v1111
        %1892 = vmatmul.mubr.f32.gmra.mxu0 %v703
        %v1893 = vpop.f32.mrf.mxu0
        %v1894 = vadd.f32 %v1685, %v1893
        %v1895 = vpop.f32.mrf.mxu0
        %v1896 = vadd.f32 %v1687, %v1895
        %1897 = vmatprep.mubr.f32.mxu0 %v1114
        %1898 = vmatmul.mubr.f32.gmra.mxu0 %v711
        %v1899 = vpop.f32.mrf.mxu0
        %v1900 = vadd.f32 %v1691, %v1899
        %v1901 = vpop.f32.mrf.mxu0
        %v1902 = vadd.f32 %v1693, %v1901
        %1903 = vmatprep.mubr.f32.mxu0 %v1117
        %1904 = vmatmul.mubr.f32.gmra.mxu0 %v719
        %v1905 = vpop.f32.mrf.mxu0
        %v1906 = vadd.f32 %v1697, %v1905
        %v1907 = vpop.f32.mrf.mxu0
        %v1908 = vadd.f32 %v1699, %v1907
        %1909 = vmatprep.mubr.f32.mxu0 %v1120
        %1910 = vmatmul.mubr.f32.gmra.mxu0 %v727
        %v1911 = vpop.f32.mrf.mxu0
        %v1912 = vadd.f32 %v1703, %v1911
        %v1913 = vpop.f32.mrf.mxu0
        %v1914 = vadd.f32 %v1705, %v1913
        %1915 = vmatprep.mubr.f32.mxu0 %v1123
        %1916 = vmatmul.mubr.f32.gmra.mxu0 %v735
        %v1917 = vpop.f32.mrf.mxu0
        %v1918 = vadd.f32 %v1709, %v1917
        %v1919 = vpop.f32.mrf.mxu0
        %v1920 = vadd.f32 %v1711, %v1919
        %1921 = vmatprep.mubr.f32.mxu0 %v1126
        %1922 = vmatmul.mubr.f32.gmra.mxu0 %v743
        %v1923 = vpop.f32.mrf.mxu0
        %v1924 = vadd.f32 %v1715, %v1923
        %v1925 = vpop.f32.mrf.mxu0
        %v1926 = vadd.f32 %v1717, %v1925
        %1927 = vmatprep.mubr.f32.mxu0 %v1129
        %1928 = vmatmul.mubr.f32.gmra.mxu0 %v751
        %v1929 = vpop.f32.mrf.mxu0
        %v1930 = vadd.f32 %v1721, %v1929
        %v1931 = vpop.f32.mrf.mxu0
        %v1932 = vadd.f32 %v1723, %v1931
        %1933 = vmatprep.mubr.f32.mxu0 %v1132
        %1934 = vmatmul.mubr.f32.gmra.mxu0 %v759
        %v1935 = vpop.f32.mrf.mxu0
        %v1936 = vadd.f32 %v1727, %v1935
        %v1937 = vpop.f32.mrf.mxu0
        %v1938 = vadd.f32 %v1729, %v1937
        %1939 = vmatprep.mubr.f32.mxu0 %v1135
        %1940 = vmatmul.mubr.f32.gmra.mxu0 %v767
        %v1941 = vpop.f32.mrf.mxu0
        %v1942 = vadd.f32 %v1733, %v1941
        %v1943 = vpop.f32.mrf.mxu0
        %v1944 = vadd.f32 %v1735, %v1943
        %1945 = vmatprep.mubr.f32.mxu0 %v1138
        %1946 = vmatmul.mubr.f32.gmra.mxu0 %v775
        %v1947 = vpop.f32.mrf.mxu0
        %v1948 = vadd.f32 %v1739, %v1947
        %v1949 = vpop.f32.mrf.mxu0
        %v1950 = vadd.f32 %v1741, %v1949
        %1951 = vmatprep.mubr.f32.mxu0 %v1141
        %1952 = vmatmul.mubr.f32.gmra.mxu0 %v783
        %v1953 = vpop.f32.mrf.mxu0
        %v1954 = vadd.f32 %v1745, %v1953
        %v1955 = vpop.f32.mrf.mxu0
        %v1956 = vadd.f32 %v1747, %v1955
        %1957 = vmatprep.mubr.f32.mxu0 %v1144
        %1958 = vmatmul.mubr.f32.gmra.mxu0 %v791
        %v1959 = vpop.f32.mrf.mxu0
        %v1960 = vadd.f32 %v1751, %v1959
        %v1961 = vpop.f32.mrf.mxu0
        %v1962 = vadd.f32 %v1753, %v1961
        %1963 = vmatprep.mubr.f32.mxu0 %v1147
        %1964 = vmatmul.mubr.f32.gmra.mxu0 %v799
        %v1965 = vpop.f32.mrf.mxu0
        %v1966 = vadd.f32 %v1757, %v1965
        %v1967 = vpop.f32.mrf.mxu0
        %v1968 = vadd.f32 %v1759, %v1967
        %1969 = vmatprep.mubr.f32.mxu0 %v1150
        %1970 = vmatmul.mubr.f32.gmra.mxu0 %v807
        %v1971 = vpop.f32.mrf.mxu0
        %v1972 = vadd.f32 %v1763, %v1971
        %v1973 = vpop.f32.mrf.mxu0
        %v1974 = vadd.f32 %v1765, %v1973
        %1975 = vmatprep.mubr.f32.mxu0 %v1153
        %1976 = vmatmul.mubr.f32.gmra.mxu0 %v815
        %v1977 = vpop.f32.mrf.mxu0
        %v1978 = vadd.f32 %v1769, %v1977
        %v1979 = vpop.f32.mrf.mxu0
        %v1980 = vadd.f32 %v1771, %v1979
        %1981 = vmatprep.mubr.f32.mxu0 %v1156
        %1982 = vmatmul.mubr.f32.gmra.mxu0 %v823
        %v1983 = vpop.f32.mrf.mxu0
        %v1984 = vadd.f32 %v1775, %v1983
        %v1985 = vpop.f32.mrf.mxu0
        %v1986 = vadd.f32 %v1777, %v1985
        %1987 = vmatprep.mubr.f32.mxu0 %v1159
        %1988 = vmatmul.mubr.f32.gmra.mxu0 %v831
        %v1989 = vpop.f32.mrf.mxu0
        %v1990 = vadd.f32 %v1781, %v1989
        %v1991 = vpop.f32.mrf.mxu0
        %v1992 = vadd.f32 %v1783, %v1991
        %1993 = vmatprep.mubr.f32.mxu0 %v1162
        %1994 = vmatmul.mubr.f32.gmra.mxu0 %v839
        %v1995 = vpop.f32.mrf.mxu0
        %v1996 = vadd.f32 %v1787, %v1995
        %v1997 = vpop.f32.mrf.mxu0
        %v1998 = vadd.f32 %v1789, %v1997
        %1999 = vdwg.mxu0
        %v2000 = vmul.f32 %v1858, 16.0
        %v2001 = vmul.f32 %v1860, 16.0
        %v2002 = vmul.f32 %v1864, 16.0
        %v2003 = vmul.f32 %v1866, 16.0
        %v2004 = vmul.f32 %v1870, 16.0
        %v2005 = vmul.f32 %v1872, 16.0
        %v2006 = vmul.f32 %v1876, 16.0
        %v2007 = vmul.f32 %v1878, 16.0
        %v2008 = vmul.f32 %v1882, 16.0
        %v2009 = vmul.f32 %v1884, 16.0
        %v2010 = vmul.f32 %v1888, 16.0
        %v2011 = vmul.f32 %v1890, 16.0
        %v2012 = vmul.f32 %v1894, 16.0
        %v2013 = vmul.f32 %v1896, 16.0
        %v2014 = vmul.f32 %v1900, 16.0
        %v2015 = vmul.f32 %v1902, 16.0
        %v2016 = vmul.f32 %v1906, 16.0
        %v2017 = vmul.f32 %v1908, 16.0
        %v2018 = vmul.f32 %v1912, 16.0
        %v2019 = vmul.f32 %v1914, 16.0
        %v2020 = vmul.f32 %v1918, 16.0
        %v2021 = vmul.f32 %v1920, 16.0
        %v2022 = vmul.f32 %v1924, 16.0
        %v2023 = vmul.f32 %v1926, 16.0
        %v2024 = vmul.f32 %v1930, 16.0
        %v2025 = vmul.f32 %v1932, 16.0
        %v2026 = vmul.f32 %v1936, 16.0
        %v2027 = vmul.f32 %v1938, 16.0
        %v2028 = vmul.f32 %v1942, 16.0
        %v2029 = vmul.f32 %v1944, 16.0
        %v2030 = vmul.f32 %v1948, 16.0
        %v2031 = vmul.f32 %v1950, 16.0
        %v2032 = vmul.f32 %v1954, 16.0
        %v2033 = vmul.f32 %v1956, 16.0
        %v2034 = vmul.f32 %v1960, 16.0
        %v2035 = vmul.f32 %v1962, 16.0
        %v2036 = vmul.f32 %v1966, 16.0
        %v2037 = vmul.f32 %v1968, 16.0
        %v2038 = vmul.f32 %v1972, 16.0
        %v2039 = vmul.f32 %v1974, 16.0
        %v2040 = vmul.f32 %v1978, 16.0
        %v2041 = vmul.f32 %v1980, 16.0
        %v2042 = vmul.f32 %v1984, 16.0
        %v2043 = vmul.f32 %v1986, 16.0
        %v2044 = vmul.f32 %v1990, 16.0
        %v2045 = vmul.f32 %v1992, 16.0
        %v2046 = vmul.f32 %v1996, 16.0
        %v2047 = vmul.f32 %v1998, 16.0
        %2048 = vst [vmem:[%s152] sm:$0xff] %v2000
        %2049 = vst [vmem:[%s152 + $0x8] sm:$0xff] %v2001
        %2050 = vst [vmem:[%s152 + $0x10] sm:$0xff] %v2002
        %2051 = vst [vmem:[%s152 + $0x18] sm:$0xff] %v2003
        %2052 = vst [vmem:[%s152 + $0x20] sm:$0xff] %v2004
        %2053 = vst [vmem:[%s152 + $0x28] sm:$0xff] %v2005
        %2054 = vst [vmem:[%s152 + $0x30] sm:$0xff] %v2006
        %2055 = vst [vmem:[%s152 + $0x38] sm:$0xff] %v2007
        %2056 = vst [vmem:[%s152 + $0x40] sm:$0xff] %v2008
        %2057 = vst [vmem:[%s152 + $0x48] sm:$0xff] %v2009
        %2058 = vst [vmem:[%s152 + $0x50] sm:$0xff] %v2010
        %2059 = vst [vmem:[%s152 + $0x58] sm:$0xff] %v2011
        %2060 = vst [vmem:[%s152 + $0x60] sm:$0xff] %v2012
        %2061 = vst [vmem:[%s152 + $0x68] sm:$0xff] %v2013
        %2062 = vst [vmem:[%s152 + $0x70] sm:$0xff] %v2014
        %2063 = vst [vmem:[%s152 + $0x78] sm:$0xff] %v2015
        %2064 = vst [vmem:[%s152 + $0x80] sm:$0xff] %v2016
        %2065 = vst [vmem:[%s152 + $0x88] sm:$0xff] %v2017
        %2066 = vst [vmem:[%s152 + $0x90] sm:$0xff] %v2018
        %2067 = vst [vmem:[%s152 + $0x98] sm:$0xff] %v2019
        %2068 = vst [vmem:[%s152 + $0xa0] sm:$0xff] %v2020
        %2069 = vst [vmem:[%s152 + $0xa8] sm:$0xff] %v2021
        %2070 = vst [vmem:[%s152 + $0xb0] sm:$0xff] %v2022
        %2071 = vst [vmem:[%s152 + $0xb8] sm:$0xff] %v2023
        %2072 = vst [vmem:[%s152 + $0xc0] sm:$0xff] %v2024
        %2073 = vst [vmem:[%s152 + $0xc8] sm:$0xff] %v2025
        %2074 = vst [vmem:[%s152 + $0xd0] sm:$0xff] %v2026
        %2075 = vst [vmem:[%s152 + $0xd8] sm:$0xff] %v2027
        %2076 = vst [vmem:[%s152 + $0xe0] sm:$0xff] %v2028
        %2077 = vst [vmem:[%s152 + $0xe8] sm:$0xff] %v2029
        %2078 = vst [vmem:[%s152 + $0xf0] sm:$0xff] %v2030
        %2079 = vst [vmem:[%s152 + $0xf8] sm:$0xff] %v2031
        %2080 = vst [vmem:[%s152 + $0x100] sm:$0xff] %v2032
        %2081 = vst [vmem:[%s152 + $0x108] sm:$0xff] %v2033
        %2082 = vst [vmem:[%s152 + $0x110] sm:$0xff] %v2034
        %2083 = vst [vmem:[%s152 + $0x118] sm:$0xff] %v2035
        %2084 = vst [vmem:[%s152 + $0x120] sm:$0xff] %v2036
        %2085 = vst [vmem:[%s152 + $0x128] sm:$0xff] %v2037
        %2086 = vst [vmem:[%s152 + $0x130] sm:$0xff] %v2038
        %2087 = vst [vmem:[%s152 + $0x138] sm:$0xff] %v2039
        %2088 = vst [vmem:[%s152 + $0x140] sm:$0xff] %v2040
        %2089 = vst [vmem:[%s152 + $0x148] sm:$0xff] %v2041
        %2090 = vst [vmem:[%s152 + $0x150] sm:$0xff] %v2042
        %2091 = vst [vmem:[%s152 + $0x158] sm:$0xff] %v2043
        %2092 = vst [vmem:[%s152 + $0x160] sm:$0xff] %v2044
        %2093 = vst [vmem:[%s152 + $0x168] sm:$0xff] %v2045
        %2094 = vst [vmem:[%s152 + $0x170] sm:$0xff] %v2046
        %2095 = vst [vmem:[%s152 + $0x178] sm:$0xff] %v2047
        %s2096 = sand.u32 %s72, 1
        %s2097 = scalar_lea.sflag [#allocation4], %s2096
        %s2098 = sand.u32 %s72, 1
        %s2099 = smul.addr %s2098, 384
        %s2100 = scalar_lea.vmem [#allocation5], %s2099
        // Predicated region
        $region33: #{tpu_custom_call.1} parent=27 // pred_check
          %p2101 = pneg %p82
        $region34: #{tpu_custom_call.1} parent=27 // pred_check_branch
          %2103 = sbr.rel (%p2101) target = $region36
        $region35: #{tpu_custom_call.1} parent=27 // pred_region
          %s2104 = smul.u32 24, %s17
          %s2106 = ssub.s32 6144, 6144
          %2107 = vsyncadd %s2097, %s2106
          %s2108 = smul.addr %s2104, 2
          %s2109 = smul.addr %s2108, 128
          %s2110 = scalar_lea.hbm %s2, %s2109
          %s2111 = sshll.u32 %s2100, 4
          %s2112 = int_to_ptr.vmem [resolvable:$true] %s2111
          %2117 = dma.vmem_to_hbm [thread:$0]  %s2112, 6144, %s2110, %s2097, 256, 256, 16
        $region36: #{tpu_custom_call.1} parent=27 // pred_fallthru
          _
      $region28: #{tpu_custom_call.1} parent=5 // pred_fallthru
        _
      %p2118 = scmp.le.s32.totalorder 2, %s12
      // Predicated region
      $region37: #{tpu_custom_call.1} parent=5 // pred_check
        %p2119 = pneg %p2118
      $region38: #{tpu_custom_call.1} parent=5 // pred_check_branch
        %2121 = sbr.rel (%p2119) target = $region40
      $region39: #{tpu_custom_call.1} parent=5 // pred_region
        %s2122 = ssub.s32 %s12, 2
        // Predicated region
        $region41: #{tpu_custom_call.1} parent=39 // pred_check
          %p2123 = pneg %p88
        $region42: #{tpu_custom_call.1} parent=39 // pred_check_branch
          %2125 = sbr.rel (%p2123) target = $region44
        $region43: #{tpu_custom_call.1} parent=39 // pred_region
          %s2126 = sand.u32 %s73, 1
          %s2127 = scalar_lea.sflag [#allocation4], %s2126
          %s2128 = sand.u32 %s73, 1
          %s2129 = smul.addr %s2128, 384
          %s2130 = scalar_lea.vmem [#allocation5], %s2129
          %2131 = dma.done %s2127, 6144
        $region44: #{tpu_custom_call.1} parent=39 // pred_fallthru
          _
      $region40: #{tpu_custom_call.1} parent=5 // pred_fallthru
        _
    $region6: #{tpu_custom_call.1} parent=1 // loop_footer
      %s16 = sadd.s32 1, %s12
    $region7: #{tpu_custom_call.1} parent=1 // loop_footer_branch
      %11 = sbr.rel target = $region3
    $region8: #{tpu_custom_call.1} parent=1 // loop_exit
      _
    %2132 = vsyncpa [#allocation3], 1
    %s2133 = scalar_lea.sflag [#allocation3], 1
    %2134 = vsyncpa %s2133, 1
    %2135 = vsyncpa [#allocation4], 1
    %s2136 = scalar_lea.sflag [#allocation4], 1
    %2137 = vsyncpa %s2136, 1

</llo_original>
